<compile_context>
chip_gen: v7x
topology: tpu7x:2x2x1
jax: 0.10.0
libtpu: 0.0.40
codegen_flags: <defaults>
</compile_context>

<pallas_src>
import functools
import math

import jax
import jax.numpy as jnp
from jax.experimental import pallas as pl
from jax.experimental.pallas import tpu as pltpu

LANE = 128     # pad feature dims to the 128-lane width
TILE_N = 256   # node row / col tile (multiple of 8 and 128)


def _round_up(x, m):
    return ((x + m - 1) // m) * m


def _nbytes(shape, dtype):
    return int(jnp.dtype(dtype).itemsize) * int(math.prod(shape))


def _vmem_limit(block_shapes_dtypes, scratch_shapes_dtypes=()):
    """Explicit scoped-VMEM budget: 2x (double-buffer) per pipelined block + scratch."""
    est = sum(2 * _nbytes(s, d) for s, d in block_shapes_dtypes)
    est += sum(_nbytes(s, d) for s, d in scratch_shapes_dtypes)
    est = int(est * 1.4) + (1 << 20)                       # ~40% headroom + 1 MiB
    return int(min(max(est, 16 * 1024 * 1024), 48 * 1024 * 1024))


# ----------------------------------------------------------------------------
# Pallas kernels
# ----------------------------------------------------------------------------
def sage_layer_a_kernel(w_ref, xk_ref, xi_ref, wcat_ref, b_ref, o_ref, acc_ref):
    """neigh = W @ x (tiled reduction) -> L2-norm -> [x|neigh] @ [lin;agg] + b."""
    k = pl.program_id(1)

    @pl.when(k == 0)
    def _():
        acc_ref[...] = jnp.zeros_like(acc_ref)

    # Propagation matmul tile: W (bf16) @ x-tile (cast to bf16), accumulate in f32.
    acc_ref[...] += jnp.dot(w_ref[...], xk_ref[...].astype(jnp.bfloat16),
                            preferred_element_type=jnp.float32)

    @pl.when(k == pl.num_programs(1) - 1)
    def _():
        neigh = acc_ref[...]
        # F.normalize(p=2, dim=-1, eps=1e-12) == v * rsqrt(max(sum v^2, eps^2)); EUP rsqrt.
        inv = jax.lax.rsqrt(
            jnp.maximum(jnp.sum(neigh * neigh, axis=-1, keepdims=True), 1e-24))
        neigh = neigh * inv
        # Fused projection: one MXU op with K = 2 * Fin instead of two K = Fin dots.
        xin = jnp.concatenate([xi_ref[...], neigh], axis=-1).astype(jnp.bfloat16)
        o_ref[...] = jnp.dot(xin, wcat_ref[...],
                             preferred_element_type=jnp.float32) + b_ref[...]


def sage_layer_b_kernel(w_ref, hk_ref, o_ref, acc_ref):
    """out = relu(L2-normalize(W @ h))  (second propagate of the layer + GNNStack relu)."""
    k = pl.program_id(1)

    @pl.when(k == 0)
    def _():
        acc_ref[...] = jnp.zeros_like(acc_ref)

    acc_ref[...] += jnp.dot(w_ref[...], hk_ref[...].astype(jnp.bfloat16),
                            preferred_element_type=jnp.float32)

    @pl.when(k == pl.num_programs(1) - 1)
    def _():
        v = acc_ref[...]
        inv = jax.lax.rsqrt(
            jnp.maximum(jnp.sum(v * v, axis=-1, keepdims=True), 1e-24))
        o_ref[...] = jnp.maximum(v * inv, 0.0)


def post_mp_kernel(x_ref, w1_ref, b1_ref, w2_ref, b2_ref, o_ref, *, valid_out):
    """post_mp = Linear -> Dropout(id) -> Linear, then masked log_softmax(dim=1)."""
    h = jnp.dot(x_ref[...], w1_ref[...], preferred_element_type=jnp.float32) + b1_ref[...]
    y = jnp.dot(h, w2_ref[...], preferred_element_type=jnp.float32) + b2_ref[...]
    # Mask lane padding so it cannot pollute the softmax over dim=1.
    lane = jax.lax.broadcasted_iota(jnp.int32, y.shape, dimension=1)
    y = jnp.where(lane < valid_out, y, -1e30)
    m = jnp.max(y, axis=1, keepdims=True)
    z = y - m
    o_ref[...] = z - jnp.log(jnp.sum(jnp.exp(z), axis=1, keepdims=True))


# ----------------------------------------------------------------------------
# Wrappers (tiled pallas_calls)
# ----------------------------------------------------------------------------
def sage_layer_a(W, x, wcat, bcat, *, tm=TILE_N, tk=TILE_N):
    Np = W.shape[0]
    Fin = x.shape[1]
    Hout = wcat.shape[1]
    gi, gk = Np // tm, Np // tk
    limit = _vmem_limit(
        [((tm, tk), W.dtype), ((tk, Fin), x.dtype), ((tm, Fin), x.dtype),
         (wcat.shape, wcat.dtype), (bcat.shape, bcat.dtype), ((tm, Hout), jnp.float32)],
        [((tm, Fin), jnp.float32)])
    return pl.pallas_call(
        sage_layer_a_kernel,
        out_shape=jax.ShapeDtypeStruct((Np, Hout), jnp.float32),
        grid_spec=pltpu.PrefetchScalarGridSpec(
            num_scalar_prefetch=0,
            grid=(gi, gk),
            in_specs=[
                pl.BlockSpec((tm, tk), lambda i, k: (i, k)),     # W tile
                pl.BlockSpec((tk, Fin), lambda i, k: (k, 0)),    # x (reduction view)
                pl.BlockSpec((tm, Fin), lambda i, k: (i, 0)),    # x (row view, for lin)
                pl.BlockSpec(wcat.shape, lambda i, k: (0, 0)),   # fused [lin_w; agg_w]
                pl.BlockSpec(bcat.shape, lambda i, k: (0, 0)),   # fused bias
            ],
            out_specs=pl.BlockSpec((tm, Hout), lambda i, k: (i, 0)),
            scratch_shapes=[pltpu.VMEM((tm, Fin), jnp.float32)],
        ),
        compiler_params=pltpu.CompilerParams(
            dimension_semantics=("parallel", "arbitrary"),
            vmem_limit_bytes=limit),
    )(W, x, x, wcat, bcat)


def sage_layer_b(W, h, *, tm=TILE_N, tk=TILE_N):
    Np = W.shape[0]
    Hf = h.shape[1]
    gi, gk = Np // tm, Np // tk
    limit = _vmem_limit(
        [((tm, tk), W.dtype), ((tk, Hf), h.dtype), ((tm, Hf), jnp.float32)],
        [((tm, Hf), jnp.float32)])
    return pl.pallas_call(
        sage_layer_b_kernel,
        out_shape=jax.ShapeDtypeStruct((Np, Hf), jnp.float32),
        grid_spec=pltpu.PrefetchScalarGridSpec(
            num_scalar_prefetch=0,
            grid=(gi, gk),
            in_specs=[
                pl.BlockSpec((tm, tk), lambda i, k: (i, k)),
                pl.BlockSpec((tk, Hf), lambda i, k: (k, 0)),
            ],
            out_specs=pl.BlockSpec((tm, Hf), lambda i, k: (i, 0)),
            scratch_shapes=[pltpu.VMEM((tm, Hf), jnp.float32)],
        ),
        compiler_params=pltpu.CompilerParams(
            dimension_semantics=("parallel", "arbitrary"),
            vmem_limit_bytes=limit),
    )(W, h)


def post_mp(x, w1, b1, w2, b2, *, valid_out, tm=TILE_N):
    Np, Hp = x.shape
    Op = w2.shape[1]
    limit = _vmem_limit(
        [((tm, Hp), x.dtype), (w1.shape, w1.dtype), (b1.shape, b1.dtype),
         (w2.shape, w2.dtype), (b2.shape, b2.dtype), ((tm, Op), jnp.float32)])
    return pl.pallas_call(
        functools.partial(post_mp_kernel, valid_out=valid_out),
        out_shape=jax.ShapeDtypeStruct((Np, Op), jnp.float32),
        grid_spec=pltpu.PrefetchScalarGridSpec(
            num_scalar_prefetch=0,
            grid=(Np // tm,),
            in_specs=[
                pl.BlockSpec((tm, Hp), lambda i: (i, 0)),
                pl.BlockSpec(w1.shape, lambda i: (0, 0)),
                pl.BlockSpec(b1.shape, lambda i: (0, 0)),
                pl.BlockSpec(w2.shape, lambda i: (0, 0)),
                pl.BlockSpec(b2.shape, lambda i: (0, 0)),
            ],
            out_specs=pl.BlockSpec((tm, Op), lambda i: (i, 0)),
        ),
        compiler_params=pltpu.CompilerParams(
            dimension_semantics=("parallel",),
            vmem_limit_bytes=limit),
    )(x, w1, b1, w2, b2)


# ----------------------------------------------------------------------------
# Glue: propagation matrix, padding, full forward
# ----------------------------------------------------------------------------
def build_propagation_matrix(edge_index, num_nodes, num_nodes_padded):
    """Dense (padded) W s.t. W @ x == GraphSage.propagate(edge_index, x)."""
    # TODO(synk): for large sparse graphs, replace this dense O(N^2) matrix with a
    # block-sparse formulation (per row-tile list of nonzero col-tiles fed through
    # PrefetchScalarGridSpec) so only nonzero W tiles are DMA'd and multiplied.
    row, col = edge_index[0], edge_index[1]                        # (source, target)
    deg = jnp.zeros((num_nodes,), jnp.float32).at[row].add(1.0)    # pyg_utils.degree(row)
    deg_inv_sqrt = jnp.where(deg > 0, deg ** -0.5, 0.0)
    norm = deg_inv_sqrt[row] * deg_inv_sqrt[col]                   # per-edge symmetric norm
    indeg = jnp.zeros((num_nodes,), jnp.float32).at[col].add(1.0)  # 'mean' aggregation divisor
    vals = norm / jnp.maximum(indeg[col], 1.0)
    W = jnp.zeros((num_nodes_padded, num_nodes_padded), jnp.float32).at[col, row].add(vals)
    return W.astype(jnp.bfloat16)  # halves HBM/VMEM bytes on the dominant operand


def _pad2(a, rows, cols):
    return jnp.zeros((rows, cols), a.dtype).at[:a.shape[0], :a.shape[1]].set(a)


def gnn_stack_forward(x, edge_index, params, num_layers):
    N, F = x.shape
    hidden = params["convs"][0]["lin_w"].shape[1]
    out_dim = params["post_w2"].shape[1]

    Np = _round_up(max(N, TILE_N), TILE_N)   # node dim padded to the tile size
    Fp = _round_up(F, LANE)                  # lane-dense feature dims
    Hp = _round_up(hidden, LANE)
    Op = _round_up(out_dim, LANE)

    W = build_propagation_matrix(edge_index, N, Np)
    h = _pad2(x.astype(jnp.float32), Np, Fp)

    # TODO(synk): with input_output_aliases / persistent VMEM scratch the per-layer
    # activation could stay resident instead of round-tripping HBM between kernels.
    for l in range(num_layers):
        p = params["convs"][l]
        din_p = Fp if l == 0 else Hp
        lin_w = _pad2(p["lin_w"], din_p, Hp)
        agg_w = _pad2(p["agg_w"], din_p, Hp)
        wcat = jnp.concatenate([lin_w, agg_w], axis=0).astype(jnp.bfloat16)  # [2*din_p, Hp]
        bcat = _pad2(p["lin_b"] + p["agg_b"], 1, Hp)
        out1 = sage_layer_a(W, h, wcat, bcat)    # propagate #1 + L2-norm + fused lin/agg
        h = sage_layer_b(W, out1)                # propagate #2 + L2-norm + relu

    y = post_mp(h,
                _pad2(params["post_w1"], Hp, Hp), _pad2(params["post_b1"], 1, Hp),
                _pad2(params["post_w2"], Hp, Op), _pad2(params["post_b2"], 1, Op),
                valid_out=out_dim)
    return y[:N, :out_dim]   # drop node / lane padding


# ----------------------------------------------------------------------------
# Deterministic parameter init + example run
# ----------------------------------------------------------------------------
def init_params(key, input_dim, hidden_dim, output_dim, num_layers):
    params = {"convs": []}
    dims = [input_dim] + [hidden_dim] * num_layers
    for l in range(num_layers):
        key, k1, k2 = jax.random.split(key, 3)
        din, dout = dims[l], dims[l + 1]
        params["convs"].append({
            "lin_w": 0.1 * jax.random.normal(k1, (din, dout), jnp.float32),
            "lin_b": jnp.zeros((1, dout), jnp.float32),
            "agg_w": 0.1 * jax.random.normal(k2, (din, dout), jnp.float32),
            "agg_b": jnp.zeros((1, dout), jnp.float32),
        })
    key, k1, k2 = jax.random.split(key, 3)
    params["post_w1"] = 0.1 * jax.random.normal(k1, (hidden_dim, hidden_dim), jnp.float32)
    params["post_b1"] = jnp.zeros((1, hidden_dim), jnp.float32)
    params["post_w2"] = 0.1 * jax.random.normal(k2, (hidden_dim, output_dim), jnp.float32)
    params["post_b2"] = jnp.zeros((1, output_dim), jnp.float32)
    return params


if __name__ == "__main__":
    N = 16            # nodes
    INPUT_DIM = 8
    HIDDEN_DIM = 32
    OUTPUT_DIM = 8
    NUM_LAYERS = 2
    E = 40            # random edges (made undirected, plus self-loops)

    key = jax.random.PRNGKey(0)
    kx, ke, kp = jax.random.split(key, 3)

    x = jax.random.normal(kx, (N, INPUT_DIM), jnp.float32)

    src = jax.random.randint(ke, (E,), 0, N)
    dst = jax.random.randint(jax.random.fold_in(ke, 1), (E,), 0, N)
    loops = jnp.arange(N)
    row = jnp.concatenate([src, dst, loops])
    col = jnp.concatenate([dst, src, loops])
    edge_index = jnp.stack([row, col], axis=0)   # [2, num_edges]

    params = init_params(kp, INPUT_DIM, HIDDEN_DIM, OUTPUT_DIM, NUM_LAYERS)

    out = gnn_stack_forward(x, edge_index, params, NUM_LAYERS)
    out = jax.block_until_ready(out)

    assert out.shape == (N, OUTPUT_DIM)
    assert bool(jnp.all(jnp.isfinite(out)))
    # rows of log_softmax should exp-sum to 1
    assert bool(jnp.allclose(jnp.sum(jnp.exp(out), axis=1), 1.0, atol=1e-5))
    print("KERNEL_OK")
</pallas_src>

<mosaic_0001>
module attributes {stable_mosaic.version = 11 : i64} {
  func.func @sage_layer_a_kernel(%arg0: i32, %arg1: i32, %arg2: memref<256x256xbf16, #tpu.memory_space<vmem>>, %arg3: memref<256x128xf32, #tpu.memory_space<vmem>>, %arg4: memref<256x128xf32, #tpu.memory_space<vmem>>, %arg5: memref<256x128xbf16, #tpu.memory_space<vmem>>, %arg6: memref<1x128xf32, #tpu.memory_space<vmem>>, %arg7: memref<256x128xf32, #tpu.memory_space<vmem>>, %arg8: memref<256x128xf32, #tpu.memory_space<vmem>>) attributes {dimension_semantics = [#tpu.dimension_semantics<parallel>, #tpu.dimension_semantics<arbitrary>], iteration_bounds = array<i64: 1, 1>, scalar_prefetch = 0 : i64, scratch_operands = 1 : i64, tpu.core_type = #tpu.core_type<tc>, window_params = [{transform_indices = @transform_0, window_bounds = array<i64: 256, 256>}, {transform_indices = @transform_1, window_bounds = array<i64: 256, 128>}, {transform_indices = @transform_2, window_bounds = array<i64: 256, 128>}, {pipeline_mode = #tpu.pipeline_mode<synchronous>, transform_indices = @transform_3, window_bounds = array<i64: 256, 128>}, {pipeline_mode = #tpu.pipeline_mode<synchronous>, transform_indices = @transform_4, window_bounds = array<i64: 1, 128>}, {transform_indices = @transform_5, window_bounds = array<i64: 256, 128>}]} {
    %c0_i32 = arith.constant 0 : i32
    %0 = arith.cmpi eq, %arg1, %c0_i32 : i32
    %1 = arith.extui %0 : i1 to i32
    %c0_i32_0 = arith.constant 0 : i32
    %2 = arith.cmpi ne, %1, %c0_i32_0 : i32
    scf.if %2 {
      %cst_10 = arith.constant 0.000000e+00 : f32
      %13 = vector.broadcast %cst_10 : f32 to vector<256x128xf32>
      %c0_11 = arith.constant 0 : index
      %c0_12 = arith.constant 0 : index
      %14 = vector.load %arg8[%c0_11, %c0_12] : memref<256x128xf32, #tpu.memory_space<vmem>>, vector<256x128xf32>
      tpu.vector_store %arg8[%c0_11, %c0_12], %13 {strides = array<i32>} : memref<256x128xf32, #tpu.memory_space<vmem>>, vector<256x128xf32>,
    } else {
    }
    %c0 = arith.constant 0 : index
    %c0_1 = arith.constant 0 : index
    %3 = vector.load %arg8[%c0, %c0_1] : memref<256x128xf32, #tpu.memory_space<vmem>>, vector<256x128xf32>
    %c0_2 = arith.constant 0 : index
    %c0_3 = arith.constant 0 : index
    %4 = vector.load %arg2[%c0_2, %c0_3] : memref<256x256xbf16, #tpu.memory_space<vmem>>, vector<256x256xbf16>
    %c0_4 = arith.constant 0 : index
    %c0_5 = arith.constant 0 : index
    %5 = vector.load %arg3[%c0_4, %c0_5] : memref<256x128xf32, #tpu.memory_space<vmem>>, vector<256x128xf32>
    %6 = arith.truncf %5 : vector<256x128xf32> to vector<256x128xbf16>
    %cst = arith.constant dense<0.000000e+00> : vector<256x128xf32>
    %7 = tpu.matmul %4, %6, %cst {dimension_numbers = #tpu.dot_dimension_numbers<[1], [0], [0], [1], [0, 0, 1, 1], [], []>} : vector<256x256xbf16>, vector<256x128xbf16>, vector<256x128xf32> -> vector<256x128xf32>
    %8 = arith.addf %3, %7 : vector<256x128xf32>
    %c0_6 = arith.constant 0 : index
    %c0_7 = arith.constant 0 : index
    %9 = vector.load %arg8[%c0_6, %c0_7] : memref<256x128xf32, #tpu.memory_space<vmem>>, vector<256x128xf32>
    tpu.vector_store %arg8[%c0_6, %c0_7], %8 {strides = array<i32>} : memref<256x128xf32, #tpu.memory_space<vmem>>, vector<256x128xf32>,
    %c0_i32_8 = arith.constant 0 : i32
    %10 = arith.cmpi eq, %arg1, %c0_i32_8 : i32
    %11 = arith.extui %10 : i1 to i32
    %c0_i32_9 = arith.constant 0 : i32
    %12 = arith.cmpi ne, %11, %c0_i32_9 : i32
    scf.if %12 {
      %c0_10 = arith.constant 0 : index
      %c0_11 = arith.constant 0 : index
      %13 = vector.load %arg8[%c0_10, %c0_11] : memref<256x128xf32, #tpu.memory_space<vmem>>, vector<256x128xf32>
      %14 = arith.mulf %13, %13 : vector<256x128xf32>
      %cst_12 = arith.constant dense<0.000000e+00> : vector<256xf32>
      %15 = vector.multi_reduction <add>, %14, %cst_12 [1] : vector<256x128xf32> to vector<256xf32>
      %16 = vector.shape_cast %15 : vector<256xf32> to vector<256x1xf32>
      %cst_13 = arith.constant 1.000000e-24 : f32
      %17 = vector.broadcast %cst_13 : f32 to vector<256x1xf32>
      %18 = arith.maximumf %16, %17 : vector<256x1xf32>
      %19 = math.rsqrt %18 : vector<256x1xf32>
      %20 = vector.broadcast %19 : vector<256x1xf32> to vector<256x128xf32>
      %21 = arith.mulf %13, %20 : vector<256x128xf32>
      %c0_14 = arith.constant 0 : index
      %c0_15 = arith.constant 0 : index
      %22 = vector.load %arg4[%c0_14, %c0_15] : memref<256x128xf32, #tpu.memory_space<vmem>>, vector<256x128xf32>
      %23 = tpu.concatenate %22, %21 in 1 : vector<256x128xf32>, vector<256x128xf32> -> vector<256x256xf32>
      %24 = arith.truncf %23 : vector<256x256xf32> to vector<256x256xbf16>
      %c0_16 = arith.constant 0 : index
      %c0_17 = arith.constant 0 : index
      %25 = vector.load %arg5[%c0_16, %c0_17] : memref<256x128xbf16, #tpu.memory_space<vmem>>, vector<256x128xbf16>
      %cst_18 = arith.constant dense<0.000000e+00> : vector<256x128xf32>
      %26 = tpu.matmul %24, %25, %cst_18 {dimension_numbers = #tpu.dot_dimension_numbers<[1], [0], [0], [1], [0, 0, 1, 1], [], []>} : vector<256x256xbf16>, vector<256x128xbf16>, vector<256x128xf32> -> vector<256x128xf32>
      %c0_19 = arith.constant 0 : index
      %c0_20 = arith.constant 0 : index
      %27 = vector.load %arg6[%c0_19, %c0_20] : memref<1x128xf32, #tpu.memory_space<vmem>>, vector<1x128xf32>
      %28 = vector.broadcast %27 : vector<1x128xf32> to vector<256x128xf32>
      %29 = arith.addf %26, %28 : vector<256x128xf32>
      %c0_21 = arith.constant 0 : index
      %c0_22 = arith.constant 0 : index
      %30 = vector.load %arg7[%c0_21, %c0_22] : memref<256x128xf32, #tpu.memory_space<vmem>>, vector<256x128xf32>
      tpu.vector_store %arg7[%c0_21, %c0_22], %29 {strides = array<i32>} : memref<256x128xf32, #tpu.memory_space<vmem>>, vector<256x128xf32>,
    } else {
    }
    return
  }
  func.func @transform_0(%arg0: i32, %arg1: i32) -> (i32, i32) {
    %c0_i32 = arith.constant 0 : i32
    return %arg0, %arg1 : i32, i32
  }
  func.func @transform_1(%arg0: i32, %arg1: i32) -> (i32, i32) {
    %c0_i32 = arith.constant 0 : i32
    %c0_i32_0 = arith.constant 0 : i32
    return %arg1, %c0_i32 : i32, i32
  }
  func.func @transform_2(%arg0: i32, %arg1: i32) -> (i32, i32) {
    %c0_i32 = arith.constant 0 : i32
    %c0_i32_0 = arith.constant 0 : i32
    return %arg0, %c0_i32 : i32, i32
  }
  func.func @transform_3(%arg0: i32, %arg1: i32) -> (i32, i32) {
    %c0_i32 = arith.constant 0 : i32
    %c0_i32_0 = arith.constant 0 : i32
    %c0_i32_1 = arith.constant 0 : i32
    return %c0_i32, %c0_i32_0 : i32, i32
  }
  func.func @transform_4(%arg0: i32, %arg1: i32) -> (i32, i32) {
    %c0_i32 = arith.constant 0 : i32
    %c0_i32_0 = arith.constant 0 : i32
    %c0_i32_1 = arith.constant 0 : i32
    return %c0_i32, %c0_i32_0 : i32, i32
  }
  func.func @transform_5(%arg0: i32, %arg1: i32) -> (i32, i32) {
    %c0_i32 = arith.constant 0 : i32
    %c0_i32_0 = arith.constant 0 : i32
    return %arg0, %c0_i32 : i32, i32
  }
}

</mosaic_0001>

<llo_original>
// kernel: tpu_custom_call.1
$region0: #{tpu_custom_call.1}
  #allocation0 [shape = 'u32[]', space=smem, size = 0x4, offset = 0x4, fixed_abs, tag = 'smem constant byte address 0x4 - core index']
  #allocation1 [shape = 'u32[144,128]{1,0:T(1,128)}', space=vmem, size = 0x12000, scoped, tag = 'internal scratch']
  #allocation2 [shape = 'f32[256,128]{1,0:T(8,128)}', space=vmem, size = 0x20000, scoped, tag = 'scratch operand']
  %s0 = inlined_call_operand.hbm [shape: bf16[256,256], index: 0, kind: input, shape index: {}]
  %s1 = inlined_call_operand.hbm [shape: f32[256,128], index: 1, kind: input, shape index: {}]
  %s2 = inlined_call_operand.hbm [shape: f32[256,128], index: 2, kind: input, shape index: {}]
  %s3 = inlined_call_operand.hbm [shape: bf16[256,128], index: 3, kind: input, shape index: {}]
  %s4 = inlined_call_operand.vmem [shape: f32[1,128], index: 4, kind: input, shape index: {}]
  %s5 = inlined_call_operand.hbm [shape: f32[256,128], index: 5, kind: output, shape index: {}]
  %s6 = sld [smem:[#allocation0]]
  $region54: #{tpu_custom_call.1} parent=0
    _
  %s8 = ssub.s32 1, %s6
  %s9 = scalar_select 0, %s8, %s6
  $region1: #{tpu_custom_call.1} parent=0
    #allocation3 [shape = 'u8[131072]{0}', space=vmem, size = 0x20000, scoped, tag = 'input window, operand 0, single buffered']
    #allocation4 [shape = 's32[1]{0}', space=sflag, size = 0x4, scoped, tag = 'scoped memory for tpu_custom_call.1']
    #allocation5 [shape = 's32[1]{0}', space=sflag, size = 0x4, scoped, tag = 'scoped memory for tpu_custom_call.1']
    #allocation6 [shape = 'u8[131072]{0}', space=vmem, size = 0x20000, scoped, tag = 'input window, operand 1, single buffered']
    #allocation7 [shape = 's32[1]{0}', space=sflag, size = 0x4, scoped, tag = 'scoped memory for tpu_custom_call.1']
    #allocation8 [shape = 'u8[131072]{0}', space=vmem, size = 0x20000, scoped, tag = 'input window, operand 2, single buffered']
    #allocation9 [shape = 'u8[65536]{0}', space=vmem, size = 0x10000, scoped, tag = 'input window, operand 3, single buffered']
    #allocation10 [shape = 's32[1]{0}', space=sflag, size = 0x4, scoped, tag = 'scoped memory for tpu_custom_call.1']
    #allocation11 [shape = 'u8[131072]{0}', space=vmem, size = 0x20000, scoped, tag = 'output window, operand 0, single buffered']
    %10 = vsyncpa [#allocation4], 0
    %11 = vsyncpa [#allocation7], 0
    %12 = vsyncpa [#allocation10], 0
    %13 = vsyncpa [#allocation5], 0
    // Predicated region
    $region2: #{tpu_custom_call.1} parent=1 // pred_check
      _
    $region3: #{tpu_custom_call.1} parent=1 // pred_check_branch
      %15 = sbr.rel (0) target = $region5
    $region4: #{tpu_custom_call.1} parent=1 // pred_region
      %s17 = ssub.s32 4096, 4096
      %18 = vsyncadd [#allocation4], %s17
      %s19 = sshll.u32 [#allocation3], 4
      %s20 = int_to_ptr.vmem [resolvable:$true] %s19
      %25 = dma.hbm_to_vmem [thread:$0]  %s0, 4096, %s20, [#allocation4], 128, 128, 8
    $region5: #{tpu_custom_call.1} parent=1 // pred_fallthru
      _
    // Predicated region
    $region6: #{tpu_custom_call.1} parent=1 // pred_check
      _
    $region7: #{tpu_custom_call.1} parent=1 // pred_check_branch
      %27 = sbr.rel (0) target = $region9
    $region8: #{tpu_custom_call.1} parent=1 // pred_region
      %s29 = ssub.s32 4096, 4096
      %30 = vsyncadd [#allocation7], %s29
      %s31 = sshll.u32 [#allocation6], 4
      %s32 = int_to_ptr.vmem [resolvable:$true] %s31
      %37 = dma.hbm_to_vmem [thread:$0]  %s1, 4096, %s32, [#allocation7], 128, 128, 8
    $region9: #{tpu_custom_call.1} parent=1 // pred_fallthru
      _
    // Predicated region
    $region10: #{tpu_custom_call.1} parent=1 // pred_check
      _
    $region11: #{tpu_custom_call.1} parent=1 // pred_check_branch
      %39 = sbr.rel (0) target = $region13
    $region12: #{tpu_custom_call.1} parent=1 // pred_region
      %s41 = ssub.s32 4096, 4096
      %42 = vsyncadd [#allocation7], %s41
      %s43 = sshll.u32 [#allocation8], 4
      %s44 = int_to_ptr.vmem [resolvable:$true] %s43
      %49 = dma.hbm_to_vmem [thread:$0]  %s2, 4096, %s44, [#allocation7], 128, 128, 8
    $region13: #{tpu_custom_call.1} parent=1 // pred_fallthru
      _
    // Predicated region
    $region14: #{tpu_custom_call.1} parent=1 // pred_check
      _
    $region15: #{tpu_custom_call.1} parent=1 // pred_check_branch
      %51 = sbr.rel (0) target = $region17
    $region16: #{tpu_custom_call.1} parent=1 // pred_region
      %s53 = ssub.s32 2048, 2048
      %54 = vsyncadd [#allocation10], %s53
      %s55 = sshll.u32 [#allocation9], 4
      %s56 = int_to_ptr.vmem [resolvable:$true] %s55
      %61 = dma.hbm_to_vmem [thread:$0]  %s3, 2048, %s56, [#allocation10], 64, 64, 4
    $region17: #{tpu_custom_call.1} parent=1 // pred_fallthru
      _
    // Predicated region
    $region18: #{tpu_custom_call.1} parent=1 // pred_check
      _
    $region19: #{tpu_custom_call.1} parent=1 // pred_check_branch
      %63 = sbr.rel (0) target = $region21
    $region20: #{tpu_custom_call.1} parent=1 // pred_region
      _
    $region21: #{tpu_custom_call.1} parent=1 // pred_fallthru
      _
    // Predicated region
    $region22: #{tpu_custom_call.1} parent=1 // pred_check
      _
    $region23: #{tpu_custom_call.1} parent=1 // pred_check_branch
      %65 = sbr.rel (0) target = $region25
    $region24: #{tpu_custom_call.1} parent=1 // pred_region
      %66 = dma.done [#allocation4], 4096
    $region25: #{tpu_custom_call.1} parent=1 // pred_fallthru
      _
    // Predicated region
    $region26: #{tpu_custom_call.1} parent=1 // pred_check
      _
    $region27: #{tpu_custom_call.1} parent=1 // pred_check_branch
      %68 = sbr.rel (0) target = $region29
    $region28: #{tpu_custom_call.1} parent=1 // pred_region
      %69 = dma.done [#allocation7], 4096
    $region29: #{tpu_custom_call.1} parent=1 // pred_fallthru
      _
    // Predicated region
    $region30: #{tpu_custom_call.1} parent=1 // pred_check
      _
    $region31: #{tpu_custom_call.1} parent=1 // pred_check_branch
      %71 = sbr.rel (0) target = $region33
    $region32: #{tpu_custom_call.1} parent=1 // pred_region
      %72 = dma.done [#allocation7], 4096
    $region33: #{tpu_custom_call.1} parent=1 // pred_fallthru
      _
    // Predicated region
    $region34: #{tpu_custom_call.1} parent=1 // pred_check
      _
    $region35: #{tpu_custom_call.1} parent=1 // pred_check_branch
      %74 = sbr.rel (0) target = $region37
    $region36: #{tpu_custom_call.1} parent=1 // pred_region
      %75 = dma.done [#allocation10], 2048
    $region37: #{tpu_custom_call.1} parent=1 // pred_fallthru
      _
    %p77 = scmp.eq.s32.totalorder 0, 0
    // Predicated region
    $region38: #{tpu_custom_call.1} parent=1 // pred_check
      %p78 = pneg %p77
    $region39: #{tpu_custom_call.1} parent=1 // pred_check_branch
      %80 = sbr.rel (%p78) target = $region41
    $region40: #{tpu_custom_call.1} parent=1 // pred_region
      %81 = vst [vmem:[#allocation2] sm:$0xff] 0.0
      %82 = vst [vmem:[#allocation2 + $0x8] sm:$0xff] 0.0
      %83 = vst [vmem:[#allocation2 + $0x10] sm:$0xff] 0.0
      %84 = vst [vmem:[#allocation2 + $0x18] sm:$0xff] 0.0
      %85 = vst [vmem:[#allocation2 + $0x20] sm:$0xff] 0.0
      %86 = vst [vmem:[#allocation2 + $0x28] sm:$0xff] 0.0
      %87 = vst [vmem:[#allocation2 + $0x30] sm:$0xff] 0.0
      %88 = vst [vmem:[#allocation2 + $0x38] sm:$0xff] 0.0
      %89 = vst [vmem:[#allocation2 + $0x40] sm:$0xff] 0.0
      %90 = vst [vmem:[#allocation2 + $0x48] sm:$0xff] 0.0
      %91 = vst [vmem:[#allocation2 + $0x50] sm:$0xff] 0.0
      %92 = vst [vmem:[#allocation2 + $0x58] sm:$0xff] 0.0
      %93 = vst [vmem:[#allocation2 + $0x60] sm:$0xff] 0.0
      %94 = vst [vmem:[#allocation2 + $0x68] sm:$0xff] 0.0
      %95 = vst [vmem:[#allocation2 + $0x70] sm:$0xff] 0.0
      %96 = vst [vmem:[#allocation2 + $0x78] sm:$0xff] 0.0
      %97 = vst [vmem:[#allocation2 + $0x80] sm:$0xff] 0.0
      %98 = vst [vmem:[#allocation2 + $0x88] sm:$0xff] 0.0
      %99 = vst [vmem:[#allocation2 + $0x90] sm:$0xff] 0.0
      %100 = vst [vmem:[#allocation2 + $0x98] sm:$0xff] 0.0
      %101 = vst [vmem:[#allocation2 + $0xa0] sm:$0xff] 0.0
      %102 = vst [vmem:[#allocation2 + $0xa8] sm:$0xff] 0.0
      %103 = vst [vmem:[#allocation2 + $0xb0] sm:$0xff] 0.0
      %104 = vst [vmem:[#allocation2 + $0xb8] sm:$0xff] 0.0
      %105 = vst [vmem:[#allocation2 + $0xc0] sm:$0xff] 0.0
      %106 = vst [vmem:[#allocation2 + $0xc8] sm:$0xff] 0.0
      %107 = vst [vmem:[#allocation2 + $0xd0] sm:$0xff] 0.0
      %108 = vst [vmem:[#allocation2 + $0xd8] sm:$0xff] 0.0
      %109 = vst [vmem:[#allocation2 + $0xe0] sm:$0xff] 0.0
      %110 = vst [vmem:[#allocation2 + $0xe8] sm:$0xff] 0.0
      %111 = vst [vmem:[#allocation2 + $0xf0] sm:$0xff] 0.0
      %112 = vst [vmem:[#allocation2 + $0xf8] sm:$0xff] 0.0
    $region41: #{tpu_custom_call.1} parent=1 // pred_fallthru
      _
    %v113 = vld [vmem:[#allocation2] sm:$0xff]
    %v114 = vld [vmem:[#allocation2 + $0x8] sm:$0xff]
    %v115 = vld [vmem:[#allocation2 + $0x10] sm:$0xff]
    %v116 = vld [vmem:[#allocation2 + $0x18] sm:$0xff]
    %v117 = vld [vmem:[#allocation2 + $0x20] sm:$0xff]
    %v118 = vld [vmem:[#allocation2 + $0x28] sm:$0xff]
    %v119 = vld [vmem:[#allocation2 + $0x30] sm:$0xff]
    %v120 = vld [vmem:[#allocation2 + $0x38] sm:$0xff]
    %v121 = vld [vmem:[#allocation2 + $0x40] sm:$0xff]
    %v122 = vld [vmem:[#allocation2 + $0x48] sm:$0xff]
    %v123 = vld [vmem:[#allocation2 + $0x50] sm:$0xff]
    %v124 = vld [vmem:[#allocation2 + $0x58] sm:$0xff]
    %v125 = vld [vmem:[#allocation2 + $0x60] sm:$0xff]
    %v126 = vld [vmem:[#allocation2 + $0x68] sm:$0xff]
    %v127 = vld [vmem:[#allocation2 + $0x70] sm:$0xff]
    %v128 = vld [vmem:[#allocation2 + $0x78] sm:$0xff]
    %v129 = vld [vmem:[#allocation2 + $0x80] sm:$0xff]
    %v130 = vld [vmem:[#allocation2 + $0x88] sm:$0xff]
    %v131 = vld [vmem:[#allocation2 + $0x90] sm:$0xff]
    %v132 = vld [vmem:[#allocation2 + $0x98] sm:$0xff]
    %v133 = vld [vmem:[#allocation2 + $0xa0] sm:$0xff]
    %v134 = vld [vmem:[#allocation2 + $0xa8] sm:$0xff]
    %v135 = vld [vmem:[#allocation2 + $0xb0] sm:$0xff]
    %v136 = vld [vmem:[#allocation2 + $0xb8] sm:$0xff]
    %v137 = vld [vmem:[#allocation2 + $0xc0] sm:$0xff]
    %v138 = vld [vmem:[#allocation2 + $0xc8] sm:$0xff]
    %v139 = vld [vmem:[#allocation2 + $0xd0] sm:$0xff]
    %v140 = vld [vmem:[#allocation2 + $0xd8] sm:$0xff]
    %v141 = vld [vmem:[#allocation2 + $0xe0] sm:$0xff]
    %v142 = vld [vmem:[#allocation2 + $0xe8] sm:$0xff]
    %v143 = vld [vmem:[#allocation2 + $0xf0] sm:$0xff]
    %v144 = vld [vmem:[#allocation2 + $0xf8] sm:$0xff]
    %v145 = vld [vmem:[#allocation3] sm:$0xff]
    %v146 = vld [vmem:[#allocation3 + $0x8] sm:$0xff]
    %v147 = vld [vmem:[#allocation3 + $0x10] sm:$0xff]
    %v148 = vld [vmem:[#allocation3 + $0x18] sm:$0xff]
    %v149 = vld [vmem:[#allocation3 + $0x20] sm:$0xff]
    %v150 = vld [vmem:[#allocation3 + $0x28] sm:$0xff]
    %v151 = vld [vmem:[#allocation3 + $0x30] sm:$0xff]
    %v152 = vld [vmem:[#allocation3 + $0x38] sm:$0xff]
    %v153 = vld [vmem:[#allocation3 + $0x40] sm:$0xff]
    %v154 = vld [vmem:[#allocation3 + $0x48] sm:$0xff]
    %v155 = vld [vmem:[#allocation3 + $0x50] sm:$0xff]
    %v156 = vld [vmem:[#allocation3 + $0x58] sm:$0xff]
    %v157 = vld [vmem:[#allocation3 + $0x60] sm:$0xff]
    %v158 = vld [vmem:[#allocation3 + $0x68] sm:$0xff]
    %v159 = vld [vmem:[#allocation3 + $0x70] sm:$0xff]
    %v160 = vld [vmem:[#allocation3 + $0x78] sm:$0xff]
    %v161 = vld [vmem:[#allocation3 + $0x80] sm:$0xff]
    %v162 = vld [vmem:[#allocation3 + $0x88] sm:$0xff]
    %v163 = vld [vmem:[#allocation3 + $0x90] sm:$0xff]
    %v164 = vld [vmem:[#allocation3 + $0x98] sm:$0xff]
    %v165 = vld [vmem:[#allocation3 + $0xa0] sm:$0xff]
    %v166 = vld [vmem:[#allocation3 + $0xa8] sm:$0xff]
    %v167 = vld [vmem:[#allocation3 + $0xb0] sm:$0xff]
    %v168 = vld [vmem:[#allocation3 + $0xb8] sm:$0xff]
    %v169 = vld [vmem:[#allocation3 + $0xc0] sm:$0xff]
    %v170 = vld [vmem:[#allocation3 + $0xc8] sm:$0xff]
    %v171 = vld [vmem:[#allocation3 + $0xd0] sm:$0xff]
    %v172 = vld [vmem:[#allocation3 + $0xd8] sm:$0xff]
    %v173 = vld [vmem:[#allocation3 + $0xe0] sm:$0xff]
    %v174 = vld [vmem:[#allocation3 + $0xe8] sm:$0xff]
    %v175 = vld [vmem:[#allocation3 + $0xf0] sm:$0xff]
    %v176 = vld [vmem:[#allocation3 + $0xf8] sm:$0xff]
    %v177 = vld [vmem:[#allocation6] sm:$0xff]
    %v178 = vld [vmem:[#allocation6 + $0x8] sm:$0xff]
    %v179 = vld [vmem:[#allocation6 + $0x10] sm:$0xff]
    %v180 = vld [vmem:[#allocation6 + $0x18] sm:$0xff]
    %v181 = vld [vmem:[#allocation6 + $0x20] sm:$0xff]
    %v182 = vld [vmem:[#allocation6 + $0x28] sm:$0xff]
    %v183 = vld [vmem:[#allocation6 + $0x30] sm:$0xff]
    %v184 = vld [vmem:[#allocation6 + $0x38] sm:$0xff]
    %v185 = vld [vmem:[#allocation6 + $0x40] sm:$0xff]
    %v186 = vld [vmem:[#allocation6 + $0x48] sm:$0xff]
    %v187 = vld [vmem:[#allocation6 + $0x50] sm:$0xff]
    %v188 = vld [vmem:[#allocation6 + $0x58] sm:$0xff]
    %v189 = vld [vmem:[#allocation6 + $0x60] sm:$0xff]
    %v190 = vld [vmem:[#allocation6 + $0x68] sm:$0xff]
    %v191 = vld [vmem:[#allocation6 + $0x70] sm:$0xff]
    %v192 = vld [vmem:[#allocation6 + $0x78] sm:$0xff]
    %v193 = vld [vmem:[#allocation6 + $0x80] sm:$0xff]
    %v194 = vld [vmem:[#allocation6 + $0x88] sm:$0xff]
    %v195 = vld [vmem:[#allocation6 + $0x90] sm:$0xff]
    %v196 = vld [vmem:[#allocation6 + $0x98] sm:$0xff]
    %v197 = vld [vmem:[#allocation6 + $0xa0] sm:$0xff]
    %v198 = vld [vmem:[#allocation6 + $0xa8] sm:$0xff]
    %v199 = vld [vmem:[#allocation6 + $0xb0] sm:$0xff]
    %v200 = vld [vmem:[#allocation6 + $0xb8] sm:$0xff]
    %v201 = vld [vmem:[#allocation6 + $0xc0] sm:$0xff]
    %v202 = vld [vmem:[#allocation6 + $0xc8] sm:$0xff]
    %v203 = vld [vmem:[#allocation6 + $0xd0] sm:$0xff]
    %v204 = vld [vmem:[#allocation6 + $0xd8] sm:$0xff]
    %v205 = vld [vmem:[#allocation6 + $0xe0] sm:$0xff]
    %v206 = vld [vmem:[#allocation6 + $0xe8] sm:$0xff]
    %v207 = vld [vmem:[#allocation6 + $0xf0] sm:$0xff]
    %v208 = vld [vmem:[#allocation6 + $0xf8] sm:$0xff]
    %v209 = vpack.c.bf16 %v178, %v177
    %v210 = vpack.c.bf16 %v180, %v179
    %v211 = vpack.c.bf16 %v182, %v181
    %v212 = vpack.c.bf16 %v184, %v183
    %v213 = vpack.c.bf16 %v186, %v185
    %v214 = vpack.c.bf16 %v188, %v187
    %v215 = vpack.c.bf16 %v190, %v189
    %v216 = vpack.c.bf16 %v192, %v191
    %v217 = vpack.c.bf16 %v194, %v193
    %v218 = vpack.c.bf16 %v196, %v195
    %v219 = vpack.c.bf16 %v198, %v197
    %v220 = vpack.c.bf16 %v200, %v199
    %v221 = vpack.c.bf16 %v202, %v201
    %v222 = vpack.c.bf16 %v204, %v203
    %v223 = vpack.c.bf16 %v206, %v205
    %v224 = vpack.c.bf16 %v208, %v207
    %v257 = vunpack.c.l.b16 %v145
    %v258 = vunpack.c.h.b16 %v145
    %v259 = vunpack.c.l.b16 %v146
    %v260 = vunpack.c.h.b16 %v146
    %v261 = vunpack.c.l.b16 %v147
    %v262 = vunpack.c.h.b16 %v147
    %v263 = vunpack.c.l.b16 %v148
    %v264 = vunpack.c.h.b16 %v148
    %v265 = vunpack.c.l.b16 %v149
    %v266 = vunpack.c.h.b16 %v149
    %v267 = vunpack.c.l.b16 %v150
    %v268 = vunpack.c.h.b16 %v150
    %v269 = vunpack.c.l.b16 %v151
    %v270 = vunpack.c.h.b16 %v151
    %v271 = vunpack.c.l.b16 %v152
    %v272 = vunpack.c.h.b16 %v152
    %v273 = vunpack.c.l.b16 %v153
    %v274 = vunpack.c.h.b16 %v153
    %v275 = vunpack.c.l.b16 %v154
    %v276 = vunpack.c.h.b16 %v154
    %v277 = vunpack.c.l.b16 %v155
    %v278 = vunpack.c.h.b16 %v155
    %v279 = vunpack.c.l.b16 %v156
    %v280 = vunpack.c.h.b16 %v156
    %v281 = vunpack.c.l.b16 %v157
    %v282 = vunpack.c.h.b16 %v157
    %v283 = vunpack.c.l.b16 %v158
    %v284 = vunpack.c.h.b16 %v158
    %v285 = vunpack.c.l.b16 %v159
    %v286 = vunpack.c.h.b16 %v159
    %v287 = vunpack.c.l.b16 %v160
    %v288 = vunpack.c.h.b16 %v160
    %v289 = vunpack.c.l.b16 %v161
    %v290 = vunpack.c.h.b16 %v161
    %v291 = vunpack.c.l.b16 %v162
    %v292 = vunpack.c.h.b16 %v162
    %v293 = vunpack.c.l.b16 %v163
    %v294 = vunpack.c.h.b16 %v163
    %v295 = vunpack.c.l.b16 %v164
    %v296 = vunpack.c.h.b16 %v164
    %v297 = vunpack.c.l.b16 %v165
    %v298 = vunpack.c.h.b16 %v165
    %v299 = vunpack.c.l.b16 %v166
    %v300 = vunpack.c.h.b16 %v166
    %v301 = vunpack.c.l.b16 %v167
    %v302 = vunpack.c.h.b16 %v167
    %v303 = vunpack.c.l.b16 %v168
    %v304 = vunpack.c.h.b16 %v168
    %v305 = vunpack.c.l.b16 %v169
    %v306 = vunpack.c.h.b16 %v169
    %v307 = vunpack.c.l.b16 %v170
    %v308 = vunpack.c.h.b16 %v170
    %v309 = vunpack.c.l.b16 %v171
    %v310 = vunpack.c.h.b16 %v171
    %v311 = vunpack.c.l.b16 %v172
    %v312 = vunpack.c.h.b16 %v172
    %v313 = vunpack.c.l.b16 %v173
    %v314 = vunpack.c.h.b16 %v173
    %v315 = vunpack.c.l.b16 %v174
    %v316 = vunpack.c.h.b16 %v174
    %v317 = vunpack.c.l.b16 %v175
    %v318 = vunpack.c.h.b16 %v175
    %v319 = vunpack.c.l.b16 %v176
    %v320 = vunpack.c.h.b16 %v176
    %v321 = vpack.c.b16 %v259, %v257
    %v322 = vpack.c.b16 %v260, %v258
    %v323 = vpack.c.b16 %v263, %v261
    %v324 = vpack.c.b16 %v264, %v262
    %v325 = vpack.c.b16 %v267, %v265
    %v326 = vpack.c.b16 %v268, %v266
    %v327 = vpack.c.b16 %v271, %v269
    %v328 = vpack.c.b16 %v272, %v270
    %v329 = vpack.c.b16 %v275, %v273
    %v330 = vpack.c.b16 %v276, %v274
    %v331 = vpack.c.b16 %v279, %v277
    %v332 = vpack.c.b16 %v280, %v278
    %v333 = vpack.c.b16 %v283, %v281
    %v334 = vpack.c.b16 %v284, %v282
    %v335 = vpack.c.b16 %v287, %v285
    %v336 = vpack.c.b16 %v288, %v286
    %v337 = vpack.c.b16 %v291, %v289
    %v338 = vpack.c.b16 %v292, %v290
    %v339 = vpack.c.b16 %v295, %v293
    %v340 = vpack.c.b16 %v296, %v294
    %v341 = vpack.c.b16 %v299, %v297
    %v342 = vpack.c.b16 %v300, %v298
    %v343 = vpack.c.b16 %v303, %v301
    %v344 = vpack.c.b16 %v304, %v302
    %v345 = vpack.c.b16 %v307, %v305
    %v346 = vpack.c.b16 %v308, %v306
    %v347 = vpack.c.b16 %v311, %v309
    %v348 = vpack.c.b16 %v312, %v310
    %v349 = vpack.c.b16 %v315, %v313
    %v350 = vpack.c.b16 %v316, %v314
    %v351 = vpack.c.b16 %v319, %v317
    %v352 = vpack.c.b16 %v320, %v318
    %385 = vmatprep.subr.bf16.mxu0 0
    %386 = vmatpush1.bf16.msra.mxu0 %v209
    %387 = vmatprep.subr.bf16.mxu0 0
    %388 = vmatpush1.bf16.msra.mxu0 %v210
    %389 = vmatprep.subr.bf16.mxu0 0
    %390 = vmatpush1.bf16.msra.mxu0 %v211
    %391 = vmatprep.subr.bf16.mxu0 0
    %392 = vmatpush1.bf16.msra.mxu0 %v212
    %393 = vmatprep.subr.bf16.mxu0 0
    %394 = vmatpush1.bf16.msra.mxu0 %v213
    %395 = vmatprep.subr.bf16.mxu0 0
    %396 = vmatpush1.bf16.msra.mxu0 %v214
    %397 = vmatprep.subr.bf16.mxu0 0
    %398 = vmatpush1.bf16.msra.mxu0 %v215
    %399 = vmatprep.subr.bf16.mxu0 0
    %400 = vmatpush1.bf16.msra.mxu0 %v216
    %401 = vmatprep.subr.bf16.mxu0 0
    %402 = vmatpush1.bf16.msra.mxu0 %v217
    %403 = vmatprep.subr.bf16.mxu0 0
    %404 = vmatpush1.bf16.msra.mxu0 %v218
    %405 = vmatprep.subr.bf16.mxu0 0
    %406 = vmatpush1.bf16.msra.mxu0 %v219
    %407 = vmatprep.subr.bf16.mxu0 0
    %408 = vmatpush1.bf16.msra.mxu0 %v220
    %409 = vmatprep.subr.bf16.mxu0 0
    %410 = vmatpush1.bf16.msra.mxu0 %v221
    %411 = vmatprep.subr.bf16.mxu0 0
    %412 = vmatpush1.bf16.msra.mxu0 %v222
    %413 = vmatprep.subr.bf16.mxu0 0
    %414 = vmatpush1.bf16.msra.mxu0 %v223
    %415 = vmatprep.subr.bf16.mxu0 0
    %416 = vmatpush1.bf16.msra.mxu0 %v224
    %417 = vmatprep.mubr.bf16.mxu0 %v322
    %418 = vmatmul.mubr.bf16.gmra.mrb[0].mxu0 %v321
    %v419 = vpop.f32.mrb[0].mxu0
    %v420 = vadd.f32 0.0, %v419
    %v421 = vpop.f32.mrb[0].mxu0
    %v422 = vpop.f32.mrb[0].mxu0
    %v423 = vadd.f32 0.0, %v422
    %v424 = vpop.f32.mrb[0].mxu0
    %425 = vmatprep.mubr.bf16.mxu0 %v324
    %426 = vmatmul.mubr.bf16.gmra.mrb[0].mxu0 %v323
    %v427 = vpop.f32.mrb[0].mxu0
    %v428 = vadd.f32 0.0, %v427
    %v429 = vpop.f32.mrb[0].mxu0
    %v430 = vpop.f32.mrb[0].mxu0
    %v431 = vadd.f32 0.0, %v430
    %v432 = vpop.f32.mrb[0].mxu0
    %433 = vmatprep.mubr.bf16.mxu0 %v326
    %434 = vmatmul.mubr.bf16.gmra.mrb[0].mxu0 %v325
    %v435 = vpop.f32.mrb[0].mxu0
    %v436 = vadd.f32 0.0, %v435
    %v437 = vpop.f32.mrb[0].mxu0
    %v438 = vpop.f32.mrb[0].mxu0
    %v439 = vadd.f32 0.0, %v438
    %v440 = vpop.f32.mrb[0].mxu0
    %441 = vmatprep.mubr.bf16.mxu0 %v328
    %442 = vmatmul.mubr.bf16.gmra.mrb[0].mxu0 %v327
    %v443 = vpop.f32.mrb[0].mxu0
    %v444 = vadd.f32 0.0, %v443
    %v445 = vpop.f32.mrb[0].mxu0
    %v446 = vpop.f32.mrb[0].mxu0
    %v447 = vadd.f32 0.0, %v446
    %v448 = vpop.f32.mrb[0].mxu0
    %449 = vmatprep.mubr.bf16.mxu0 %v330
    %450 = vmatmul.mubr.bf16.gmra.mrb[0].mxu0 %v329
    %v451 = vpop.f32.mrb[0].mxu0
    %v452 = vadd.f32 0.0, %v451
    %v453 = vpop.f32.mrb[0].mxu0
    %v454 = vpop.f32.mrb[0].mxu0
    %v455 = vadd.f32 0.0, %v454
    %v456 = vpop.f32.mrb[0].mxu0
    %457 = vmatprep.mubr.bf16.mxu0 %v332
    %458 = vmatmul.mubr.bf16.gmra.mrb[0].mxu0 %v331
    %v459 = vpop.f32.mrb[0].mxu0
    %v460 = vadd.f32 0.0, %v459
    %v461 = vpop.f32.mrb[0].mxu0
    %v462 = vpop.f32.mrb[0].mxu0
    %v463 = vadd.f32 0.0, %v462
    %v464 = vpop.f32.mrb[0].mxu0
    %465 = vmatprep.mubr.bf16.mxu0 %v334
    %466 = vmatmul.mubr.bf16.gmra.mrb[0].mxu0 %v333
    %v467 = vpop.f32.mrb[0].mxu0
    %v468 = vadd.f32 0.0, %v467
    %v469 = vpop.f32.mrb[0].mxu0
    %v470 = vpop.f32.mrb[0].mxu0
    %v471 = vadd.f32 0.0, %v470
    %v472 = vpop.f32.mrb[0].mxu0
    %473 = vmatprep.mubr.bf16.mxu0 %v336
    %474 = vmatmul.mubr.bf16.gmra.mrb[0].mxu0 %v335
    %v475 = vpop.f32.mrb[0].mxu0
    %v476 = vadd.f32 0.0, %v475
    %v477 = vpop.f32.mrb[0].mxu0
    %v478 = vpop.f32.mrb[0].mxu0
    %v479 = vadd.f32 0.0, %v478
    %v480 = vpop.f32.mrb[0].mxu0
    %481 = vmatprep.mubr.bf16.mxu0 %v338
    %482 = vmatmul.mubr.bf16.gmra.mrb[0].mxu0 %v337
    %v483 = vpop.f32.mrb[0].mxu0
    %v484 = vadd.f32 0.0, %v483
    %v485 = vpop.f32.mrb[0].mxu0
    %v486 = vpop.f32.mrb[0].mxu0
    %v487 = vadd.f32 0.0, %v486
    %v488 = vpop.f32.mrb[0].mxu0
    %489 = vmatprep.mubr.bf16.mxu0 %v340
    %490 = vmatmul.mubr.bf16.gmra.mrb[0].mxu0 %v339
    %v491 = vpop.f32.mrb[0].mxu0
    %v492 = vadd.f32 0.0, %v491
    %v493 = vpop.f32.mrb[0].mxu0
    %v494 = vpop.f32.mrb[0].mxu0
    %v495 = vadd.f32 0.0, %v494
    %v496 = vpop.f32.mrb[0].mxu0
    %497 = vmatprep.mubr.bf16.mxu0 %v342
    %498 = vmatmul.mubr.bf16.gmra.mrb[0].mxu0 %v341
    %v499 = vpop.f32.mrb[0].mxu0
    %v500 = vadd.f32 0.0, %v499
    %v501 = vpop.f32.mrb[0].mxu0
    %v502 = vpop.f32.mrb[0].mxu0
    %v503 = vadd.f32 0.0, %v502
    %v504 = vpop.f32.mrb[0].mxu0
    %505 = vmatprep.mubr.bf16.mxu0 %v344
    %506 = vmatmul.mubr.bf16.gmra.mrb[0].mxu0 %v343
    %v507 = vpop.f32.mrb[0].mxu0
    %v508 = vadd.f32 0.0, %v507
    %v509 = vpop.f32.mrb[0].mxu0
    %v510 = vpop.f32.mrb[0].mxu0
    %v511 = vadd.f32 0.0, %v510
    %v512 = vpop.f32.mrb[0].mxu0
    %513 = vmatprep.mubr.bf16.mxu0 %v346
    %514 = vmatmul.mubr.bf16.gmra.mrb[0].mxu0 %v345
    %v515 = vpop.f32.mrb[0].mxu0
    %v516 = vadd.f32 0.0, %v515
    %v517 = vpop.f32.mrb[0].mxu0
    %v518 = vpop.f32.mrb[0].mxu0
    %v519 = vadd.f32 0.0, %v518
    %v520 = vpop.f32.mrb[0].mxu0
    %521 = vmatprep.mubr.bf16.mxu0 %v348
    %522 = vmatmul.mubr.bf16.gmra.mrb[0].mxu0 %v347
    %v523 = vpop.f32.mrb[0].mxu0
    %v524 = vadd.f32 0.0, %v523
    %v525 = vpop.f32.mrb[0].mxu0
    %v526 = vpop.f32.mrb[0].mxu0
    %v527 = vadd.f32 0.0, %v526
    %v528 = vpop.f32.mrb[0].mxu0
    %529 = vmatprep.mubr.bf16.mxu0 %v350
    %530 = vmatmul.mubr.bf16.gmra.mrb[0].mxu0 %v349
    %v531 = vpop.f32.mrb[0].mxu0
    %v532 = vadd.f32 0.0, %v531
    %v533 = vpop.f32.mrb[0].mxu0
    %v534 = vpop.f32.mrb[0].mxu0
    %v535 = vadd.f32 0.0, %v534
    %v536 = vpop.f32.mrb[0].mxu0
    %537 = vmatprep.mubr.bf16.mxu0 %v352
    %538 = vmatmul.mubr.bf16.gmra.mrb[0].mxu0 %v351
    %v539 = vpop.f32.mrb[0].mxu0
    %v540 = vadd.f32 0.0, %v539
    %v541 = vpop.f32.mrb[0].mxu0
    %v542 = vpop.f32.mrb[0].mxu0
    %v543 = vadd.f32 0.0, %v542
    %v544 = vpop.f32.mrb[0].mxu0
    %545 = vdwg.mxu0
    %v546 = vadd.f32 %v113, %v420
    %v547 = vadd.f32 %v114, %v423
    %v548 = vadd.f32 %v115, %v428
    %v549 = vadd.f32 %v116, %v431
    %v550 = vadd.f32 %v117, %v436
    %v551 = vadd.f32 %v118, %v439
    %v552 = vadd.f32 %v119, %v444
    %v553 = vadd.f32 %v120, %v447
    %v554 = vadd.f32 %v121, %v452
    %v555 = vadd.f32 %v122, %v455
    %v556 = vadd.f32 %v123, %v460
    %v557 = vadd.f32 %v124, %v463
    %v558 = vadd.f32 %v125, %v468
    %v559 = vadd.f32 %v126, %v471
    %v560 = vadd.f32 %v127, %v476
    %v561 = vadd.f32 %v128, %v479
    %v562 = vadd.f32 %v129, %v484
    %v563 = vadd.f32 %v130, %v487
    %v564 = vadd.f32 %v131, %v492
    %v565 = vadd.f32 %v132, %v495
    %v566 = vadd.f32 %v133, %v500
    %v567 = vadd.f32 %v134, %v503
    %v568 = vadd.f32 %v135, %v508
    %v569 = vadd.f32 %v136, %v511
    %v570 = vadd.f32 %v137, %v516
    %v571 = vadd.f32 %v138, %v519
    %v572 = vadd.f32 %v139, %v524
    %v573 = vadd.f32 %v140, %v527
    %v574 = vadd.f32 %v141, %v532
    %v575 = vadd.f32 %v142, %v535
    %v576 = vadd.f32 %v143, %v540
    %v577 = vadd.f32 %v144, %v543
    %578 = vst [vmem:[#allocation2] sm:$0xff] %v546
    %579 = vst [vmem:[#allocation2 + $0x8] sm:$0xff] %v547
    %580 = vst [vmem:[#allocation2 + $0x10] sm:$0xff] %v548
    %581 = vst [vmem:[#allocation2 + $0x18] sm:$0xff] %v549
    %582 = vst [vmem:[#allocation2 + $0x20] sm:$0xff] %v550
    %583 = vst [vmem:[#allocation2 + $0x28] sm:$0xff] %v551
    %584 = vst [vmem:[#allocation2 + $0x30] sm:$0xff] %v552
    %585 = vst [vmem:[#allocation2 + $0x38] sm:$0xff] %v553
    %586 = vst [vmem:[#allocation2 + $0x40] sm:$0xff] %v554
    %587 = vst [vmem:[#allocation2 + $0x48] sm:$0xff] %v555
    %588 = vst [vmem:[#allocation2 + $0x50] sm:$0xff] %v556
    %589 = vst [vmem:[#allocation2 + $0x58] sm:$0xff] %v557
    %590 = vst [vmem:[#allocation2 + $0x60] sm:$0xff] %v558
    %591 = vst [vmem:[#allocation2 + $0x68] sm:$0xff] %v559
    %592 = vst [vmem:[#allocation2 + $0x70] sm:$0xff] %v560
    %593 = vst [vmem:[#allocation2 + $0x78] sm:$0xff] %v561
    %594 = vst [vmem:[#allocation2 + $0x80] sm:$0xff] %v562
    %595 = vst [vmem:[#allocation2 + $0x88] sm:$0xff] %v563
    %596 = vst [vmem:[#allocation2 + $0x90] sm:$0xff] %v564
    %597 = vst [vmem:[#allocation2 + $0x98] sm:$0xff] %v565
    %598 = vst [vmem:[#allocation2 + $0xa0] sm:$0xff] %v566
    %599 = vst [vmem:[#allocation2 + $0xa8] sm:$0xff] %v567
    %600 = vst [vmem:[#allocation2 + $0xb0] sm:$0xff] %v568
    %601 = vst [vmem:[#allocation2 + $0xb8] sm:$0xff] %v569
    %602 = vst [vmem:[#allocation2 + $0xc0] sm:$0xff] %v570
    %603 = vst [vmem:[#allocation2 + $0xc8] sm:$0xff] %v571
    %604 = vst [vmem:[#allocation2 + $0xd0] sm:$0xff] %v572
    %605 = vst [vmem:[#allocation2 + $0xd8] sm:$0xff] %v573
    %606 = vst [vmem:[#allocation2 + $0xe0] sm:$0xff] %v574
    %607 = vst [vmem:[#allocation2 + $0xe8] sm:$0xff] %v575
    %608 = vst [vmem:[#allocation2 + $0xf0] sm:$0xff] %v576
    %609 = vst [vmem:[#allocation2 + $0xf8] sm:$0xff] %v577
    // Predicated region
    $region42: #{tpu_custom_call.1} parent=1 // pred_check
      %p610 = pneg %p77
    $region43: #{tpu_custom_call.1} parent=1 // pred_check_branch
      %612 = sbr.rel (%p610) target = $region45
    $region44: #{tpu_custom_call.1} parent=1 // pred_region
      %v613 = vld [vmem:[#allocation2] sm:$0xff]
      %v614 = vld [vmem:[#allocation2 + $0x8] sm:$0xff]
      %v615 = vld [vmem:[#allocation2 + $0x10] sm:$0xff]
      %v616 = vld [vmem:[#allocation2 + $0x18] sm:$0xff]
      %v617 = vld [vmem:[#allocation2 + $0x20] sm:$0xff]
      %v618 = vld [vmem:[#allocation2 + $0x28] sm:$0xff]
      %v619 = vld [vmem:[#allocation2 + $0x30] sm:$0xff]
      %v620 = vld [vmem:[#allocation2 + $0x38] sm:$0xff]
      %v621 = vld [vmem:[#allocation2 + $0x40] sm:$0xff]
      %v622 = vld [vmem:[#allocation2 + $0x48] sm:$0xff]
      %v623 = vld [vmem:[#allocation2 + $0x50] sm:$0xff]
      %v624 = vld [vmem:[#allocation2 + $0x58] sm:$0xff]
      %v625 = vld [vmem:[#allocation2 + $0x60] sm:$0xff]
      %v626 = vld [vmem:[#allocation2 + $0x68] sm:$0xff]
      %v627 = vld [vmem:[#allocation2 + $0x70] sm:$0xff]
      %v628 = vld [vmem:[#allocation2 + $0x78] sm:$0xff]
      %v629 = vld [vmem:[#allocation2 + $0x80] sm:$0xff]
      %v630 = vld [vmem:[#allocation2 + $0x88] sm:$0xff]
      %v631 = vld [vmem:[#allocation2 + $0x90] sm:$0xff]
      %v632 = vld [vmem:[#allocation2 + $0x98] sm:$0xff]
      %v633 = vld [vmem:[#allocation2 + $0xa0] sm:$0xff]
      %v634 = vld [vmem:[#allocation2 + $0xa8] sm:$0xff]
      %v635 = vld [vmem:[#allocation2 + $0xb0] sm:$0xff]
      %v636 = vld [vmem:[#allocation2 + $0xb8] sm:$0xff]
      %v637 = vld [vmem:[#allocation2 + $0xc0] sm:$0xff]
      %v638 = vld [vmem:[#allocation2 + $0xc8] sm:$0xff]
      %v639 = vld [vmem:[#allocation2 + $0xd0] sm:$0xff]
      %v640 = vld [vmem:[#allocation2 + $0xd8] sm:$0xff]
      %v641 = vld [vmem:[#allocation2 + $0xe0] sm:$0xff]
      %v642 = vld [vmem:[#allocation2 + $0xe8] sm:$0xff]
      %v643 = vld [vmem:[#allocation2 + $0xf0] sm:$0xff]
      %v644 = vld [vmem:[#allocation2 + $0xf8] sm:$0xff]
      %v645 = vmul.f32 %v613, %v613
      %v646 = vmul.f32 %v614, %v614
      %v647 = vmul.f32 %v615, %v615
      %v648 = vmul.f32 %v616, %v616
      %v649 = vmul.f32 %v617, %v617
      %v650 = vmul.f32 %v618, %v618
      %v651 = vmul.f32 %v619, %v619
      %v652 = vmul.f32 %v620, %v620
      %v653 = vmul.f32 %v621, %v621
      %v654 = vmul.f32 %v622, %v622
      %v655 = vmul.f32 %v623, %v623
      %v656 = vmul.f32 %v624, %v624
      %v657 = vmul.f32 %v625, %v625
      %v658 = vmul.f32 %v626, %v626
      %v659 = vmul.f32 %v627, %v627
      %v660 = vmul.f32 %v628, %v628
      %v661 = vmul.f32 %v629, %v629
      %v662 = vmul.f32 %v630, %v630
      %v663 = vmul.f32 %v631, %v631
      %v664 = vmul.f32 %v632, %v632
      %v665 = vmul.f32 %v633, %v633
      %v666 = vmul.f32 %v634, %v634
      %v667 = vmul.f32 %v635, %v635
      %v668 = vmul.f32 %v636, %v636
      %v669 = vmul.f32 %v637, %v637
      %v670 = vmul.f32 %v638, %v638
      %v671 = vmul.f32 %v639, %v639
      %v672 = vmul.f32 %v640, %v640
      %v673 = vmul.f32 %v641, %v641
      %v674 = vmul.f32 %v642, %v642
      %v675 = vmul.f32 %v643, %v643
      %v676 = vmul.f32 %v644, %v644
      %677 = vadd.xlane.f32.xlu0 %v645
      %v678 = vpop.xlane.xlu0 %677
      %679 = vadd.xlane.f32.xlu0 %v646
      %v680 = vpop.xlane.xlu0 %679
      %681 = vadd.xlane.f32.xlu0 %v647
      %v682 = vpop.xlane.xlu0 %681
      %683 = vadd.xlane.f32.xlu0 %v648
      %v684 = vpop.xlane.xlu0 %683
      %685 = vadd.xlane.f32.xlu0 %v649
      %v686 = vpop.xlane.xlu0 %685
      %687 = vadd.xlane.f32.xlu0 %v650
      %v688 = vpop.xlane.xlu0 %687
      %689 = vadd.xlane.f32.xlu0 %v651
      %v690 = vpop.xlane.xlu0 %689
      %691 = vadd.xlane.f32.xlu0 %v652
      %v692 = vpop.xlane.xlu0 %691
      %693 = vadd.xlane.f32.xlu0 %v653
      %v694 = vpop.xlane.xlu0 %693
      %695 = vadd.xlane.f32.xlu0 %v654
      %v696 = vpop.xlane.xlu0 %695
      %697 = vadd.xlane.f32.xlu0 %v655
      %v698 = vpop.xlane.xlu0 %697
      %699 = vadd.xlane.f32.xlu0 %v656
      %v700 = vpop.xlane.xlu0 %699
      %701 = vadd.xlane.f32.xlu0 %v657
      %v702 = vpop.xlane.xlu0 %701
      %703 = vadd.xlane.f32.xlu0 %v658
      %v704 = vpop.xlane.xlu0 %703
      %705 = vadd.xlane.f32.xlu0 %v659
      %v706 = vpop.xlane.xlu0 %705
      %707 = vadd.xlane.f32.xlu0 %v660
      %v708 = vpop.xlane.xlu0 %707
      %709 = vadd.xlane.f32.xlu0 %v661
      %v710 = vpop.xlane.xlu0 %709
      %711 = vadd.xlane.f32.xlu0 %v662
      %v712 = vpop.xlane.xlu0 %711
      %713 = vadd.xlane.f32.xlu0 %v663
      %v714 = vpop.xlane.xlu0 %713
      %715 = vadd.xlane.f32.xlu0 %v664
      %v716 = vpop.xlane.xlu0 %715
      %717 = vadd.xlane.f32.xlu0 %v665
      %v718 = vpop.xlane.xlu0 %717
      %719 = vadd.xlane.f32.xlu0 %v666
      %v720 = vpop.xlane.xlu0 %719
      %721 = vadd.xlane.f32.xlu0 %v667
      %v722 = vpop.xlane.xlu0 %721
      %723 = vadd.xlane.f32.xlu0 %v668
      %v724 = vpop.xlane.xlu0 %723
      %725 = vadd.xlane.f32.xlu0 %v669
      %v726 = vpop.xlane.xlu0 %725
      %727 = vadd.xlane.f32.xlu0 %v670
      %v728 = vpop.xlane.xlu0 %727
      %729 = vadd.xlane.f32.xlu0 %v671
      %v730 = vpop.xlane.xlu0 %729
      %731 = vadd.xlane.f32.xlu0 %v672
      %v732 = vpop.xlane.xlu0 %731
      %733 = vadd.xlane.f32.xlu0 %v673
      %v734 = vpop.xlane.xlu0 %733
      %735 = vadd.xlane.f32.xlu0 %v674
      %v736 = vpop.xlane.xlu0 %735
      %737 = vadd.xlane.f32.xlu0 %v675
      %v738 = vpop.xlane.xlu0 %737
      %739 = vadd.xlane.f32.xlu0 %v676
      %v740 = vpop.xlane.xlu0 %739
      %v741 = vmax.f32 %v678, 1e-24
      %v742 = vmax.f32 %v680, 1e-24
      %v743 = vmax.f32 %v682, 1e-24
      %v744 = vmax.f32 %v684, 1e-24
      %v745 = vmax.f32 %v686, 1e-24
      %v746 = vmax.f32 %v688, 1e-24
      %v747 = vmax.f32 %v690, 1e-24
      %v748 = vmax.f32 %v692, 1e-24
      %v749 = vmax.f32 %v694, 1e-24
      %v750 = vmax.f32 %v696, 1e-24
      %v751 = vmax.f32 %v698, 1e-24
      %v752 = vmax.f32 %v700, 1e-24
      %v753 = vmax.f32 %v702, 1e-24
      %v754 = vmax.f32 %v704, 1e-24
      %v755 = vmax.f32 %v706, 1e-24
      %v756 = vmax.f32 %v708, 1e-24
      %v757 = vmax.f32 %v710, 1e-24
      %v758 = vmax.f32 %v712, 1e-24
      %v759 = vmax.f32 %v714, 1e-24
      %v760 = vmax.f32 %v716, 1e-24
      %v761 = vmax.f32 %v718, 1e-24
      %v762 = vmax.f32 %v720, 1e-24
      %v763 = vmax.f32 %v722, 1e-24
      %v764 = vmax.f32 %v724, 1e-24
      %v765 = vmax.f32 %v726, 1e-24
      %v766 = vmax.f32 %v728, 1e-24
      %v767 = vmax.f32 %v730, 1e-24
      %v768 = vmax.f32 %v732, 1e-24
      %v769 = vmax.f32 %v734, 1e-24
      %v770 = vmax.f32 %v736, 1e-24
      %v771 = vmax.f32 %v738, 1e-24
      %v772 = vmax.f32 %v740, 1e-24
      %v773 = vrsqrt.pop %v741
      %v774 = vrsqrt.pop %v742
      %v775 = vrsqrt.pop %v743
      %v776 = vrsqrt.pop %v744
      %v777 = vrsqrt.pop %v745
      %v778 = vrsqrt.pop %v746
      %v779 = vrsqrt.pop %v747
      %v780 = vrsqrt.pop %v748
      %v781 = vrsqrt.pop %v749
      %v782 = vrsqrt.pop %v750
      %v783 = vrsqrt.pop %v751
      %v784 = vrsqrt.pop %v752
      %v785 = vrsqrt.pop %v753
      %v786 = vrsqrt.pop %v754
      %v787 = vrsqrt.pop %v755
      %v788 = vrsqrt.pop %v756
      %v789 = vrsqrt.pop %v757
      %v790 = vrsqrt.pop %v758
      %v791 = vrsqrt.pop %v759
      %v792 = vrsqrt.pop %v760
      %v793 = vrsqrt.pop %v761
      %v794 = vrsqrt.pop %v762
      %v795 = vrsqrt.pop %v763
      %v796 = vrsqrt.pop %v764
      %v797 = vrsqrt.pop %v765
      %v798 = vrsqrt.pop %v766
      %v799 = vrsqrt.pop %v767
      %v800 = vrsqrt.pop %v768
      %v801 = vrsqrt.pop %v769
      %v802 = vrsqrt.pop %v770
      %v803 = vrsqrt.pop %v771
      %v804 = vrsqrt.pop %v772
      %v805 = vmul.f32 %v613, %v773
      %v806 = vmul.f32 %v614, %v774
      %v807 = vmul.f32 %v615, %v775
      %v808 = vmul.f32 %v616, %v776
      %v809 = vmul.f32 %v617, %v777
      %v810 = vmul.f32 %v618, %v778
      %v811 = vmul.f32 %v619, %v779
      %v812 = vmul.f32 %v620, %v780
      %v813 = vmul.f32 %v621, %v781
      %v814 = vmul.f32 %v622, %v782
      %v815 = vmul.f32 %v623, %v783
      %v816 = vmul.f32 %v624, %v784
      %v817 = vmul.f32 %v625, %v785
      %v818 = vmul.f32 %v626, %v786
      %v819 = vmul.f32 %v627, %v787
      %v820 = vmul.f32 %v628, %v788
      %v821 = vmul.f32 %v629, %v789
      %v822 = vmul.f32 %v630, %v790
      %v823 = vmul.f32 %v631, %v791
      %v824 = vmul.f32 %v632, %v792
      %v825 = vmul.f32 %v633, %v793
      %v826 = vmul.f32 %v634, %v794
      %v827 = vmul.f32 %v635, %v795
      %v828 = vmul.f32 %v636, %v796
      %v829 = vmul.f32 %v637, %v797
      %v830 = vmul.f32 %v638, %v798
      %v831 = vmul.f32 %v639, %v799
      %v832 = vmul.f32 %v640, %v800
      %v833 = vmul.f32 %v641, %v801
      %v834 = vmul.f32 %v642, %v802
      %v835 = vmul.f32 %v643, %v803
      %v836 = vmul.f32 %v644, %v804
      %v837 = vld [vmem:[#allocation8] sm:$0xff]
      %v838 = vld [vmem:[#allocation8 + $0x8] sm:$0xff]
      %v839 = vld [vmem:[#allocation8 + $0x10] sm:$0xff]
      %v840 = vld [vmem:[#allocation8 + $0x18] sm:$0xff]
      %v841 = vld [vmem:[#allocation8 + $0x20] sm:$0xff]
      %v842 = vld [vmem:[#allocation8 + $0x28] sm:$0xff]
      %v843 = vld [vmem:[#allocation8 + $0x30] sm:$0xff]
      %v844 = vld [vmem:[#allocation8 + $0x38] sm:$0xff]
      %v845 = vld [vmem:[#allocation8 + $0x40] sm:$0xff]
      %v846 = vld [vmem:[#allocation8 + $0x48] sm:$0xff]
      %v847 = vld [vmem:[#allocation8 + $0x50] sm:$0xff]
      %v848 = vld [vmem:[#allocation8 + $0x58] sm:$0xff]
      %v849 = vld [vmem:[#allocation8 + $0x60] sm:$0xff]
      %v850 = vld [vmem:[#allocation8 + $0x68] sm:$0xff]
      %v851 = vld [vmem:[#allocation8 + $0x70] sm:$0xff]
      %v852 = vld [vmem:[#allocation8 + $0x78] sm:$0xff]
      %v853 = vld [vmem:[#allocation8 + $0x80] sm:$0xff]
      %v854 = vld [vmem:[#allocation8 + $0x88] sm:$0xff]
      %v855 = vld [vmem:[#allocation8 + $0x90] sm:$0xff]
      %v856 = vld [vmem:[#allocation8 + $0x98] sm:$0xff]
      %v857 = vld [vmem:[#allocation8 + $0xa0] sm:$0xff]
      %v858 = vld [vmem:[#allocation8 + $0xa8] sm:$0xff]
      %v859 = vld [vmem:[#allocation8 + $0xb0] sm:$0xff]
      %v860 = vld [vmem:[#allocation8 + $0xb8] sm:$0xff]
      %v861 = vld [vmem:[#allocation8 + $0xc0] sm:$0xff]
      %v862 = vld [vmem:[#allocation8 + $0xc8] sm:$0xff]
      %v863 = vld [vmem:[#allocation8 + $0xd0] sm:$0xff]
      %v864 = vld [vmem:[#allocation8 + $0xd8] sm:$0xff]
      %v865 = vld [vmem:[#allocation8 + $0xe0] sm:$0xff]
      %v866 = vld [vmem:[#allocation8 + $0xe8] sm:$0xff]
      %v867 = vld [vmem:[#allocation8 + $0xf0] sm:$0xff]
      %v868 = vld [vmem:[#allocation8 + $0xf8] sm:$0xff]
      %v869 = vpack.c.bf16 %v838, %v837
      %v870 = vpack.c.bf16 %v806, %v805
      %v871 = vpack.c.bf16 %v840, %v839
      %v872 = vpack.c.bf16 %v808, %v807
      %v873 = vpack.c.bf16 %v842, %v841
      %v874 = vpack.c.bf16 %v810, %v809
      %v875 = vpack.c.bf16 %v844, %v843
      %v876 = vpack.c.bf16 %v812, %v811
      %v877 = vpack.c.bf16 %v846, %v845
      %v878 = vpack.c.bf16 %v814, %v813
      %v879 = vpack.c.bf16 %v848, %v847
      %v880 = vpack.c.bf16 %v816, %v815
      %v881 = vpack.c.bf16 %v850, %v849
      %v882 = vpack.c.bf16 %v818, %v817
      %v883 = vpack.c.bf16 %v852, %v851
      %v884 = vpack.c.bf16 %v820, %v819
      %v885 = vpack.c.bf16 %v854, %v853
      %v886 = vpack.c.bf16 %v822, %v821
      %v887 = vpack.c.bf16 %v856, %v855
      %v888 = vpack.c.bf16 %v824, %v823
      %v889 = vpack.c.bf16 %v858, %v857
      %v890 = vpack.c.bf16 %v826, %v825
      %v891 = vpack.c.bf16 %v860, %v859
      %v892 = vpack.c.bf16 %v828, %v827
      %v893 = vpack.c.bf16 %v862, %v861
      %v894 = vpack.c.bf16 %v830, %v829
      %v895 = vpack.c.bf16 %v864, %v863
      %v896 = vpack.c.bf16 %v832, %v831
      %v897 = vpack.c.bf16 %v866, %v865
      %v898 = vpack.c.bf16 %v834, %v833
      %v899 = vpack.c.bf16 %v868, %v867
      %v900 = vpack.c.bf16 %v836, %v835
      %v901 = vld [vmem:[#allocation9] sm:$0xf]
      %v902 = vld [vmem:[#allocation9 + $0x4] sm:$0xf]
      %v903 = vld [vmem:[#allocation9 + $0x8] sm:$0xf]
      %v904 = vld [vmem:[#allocation9 + $0xc] sm:$0xf]
      %v905 = vld [vmem:[#allocation9 + $0x10] sm:$0xf]
      %v906 = vld [vmem:[#allocation9 + $0x14] sm:$0xf]
      %v907 = vld [vmem:[#allocation9 + $0x18] sm:$0xf]
      %v908 = vld [vmem:[#allocation9 + $0x1c] sm:$0xf]
      %v909 = vld [vmem:[#allocation9 + $0x20] sm:$0xf]
      %v910 = vld [vmem:[#allocation9 + $0x24] sm:$0xf]
      %v911 = vld [vmem:[#allocation9 + $0x28] sm:$0xf]
      %v912 = vld [vmem:[#allocation9 + $0x2c] sm:$0xf]
      %v913 = vld [vmem:[#allocation9 + $0x30] sm:$0xf]
      %v914 = vld [vmem:[#allocation9 + $0x34] sm:$0xf]
      %v915 = vld [vmem:[#allocation9 + $0x38] sm:$0xf]
      %v916 = vld [vmem:[#allocation9 + $0x3c] sm:$0xf]
      %v917 = vld [vmem:[#allocation9 + $0x40] sm:$0xf]
      %v918 = vld [vmem:[#allocation9 + $0x44] sm:$0xf]
      %v919 = vld [vmem:[#allocation9 + $0x48] sm:$0xf]
      %v920 = vld [vmem:[#allocation9 + $0x4c] sm:$0xf]
      %v921 = vld [vmem:[#allocation9 + $0x50] sm:$0xf]
      %v922 = vld [vmem:[#allocation9 + $0x54] sm:$0xf]
      %v923 = vld [vmem:[#allocation9 + $0x58] sm:$0xf]
      %v924 = vld [vmem:[#allocation9 + $0x5c] sm:$0xf]
      %v925 = vld [vmem:[#allocation9 + $0x60] sm:$0xf]
      %v926 = vld [vmem:[#allocation9 + $0x64] sm:$0xf]
      %v927 = vld [vmem:[#allocation9 + $0x68] sm:$0xf]
      %v928 = vld [vmem:[#allocation9 + $0x6c] sm:$0xf]
      %v929 = vld [vmem:[#allocation9 + $0x70] sm:$0xf]
      %v930 = vld [vmem:[#allocation9 + $0x74] sm:$0xf]
      %v931 = vld [vmem:[#allocation9 + $0x78] sm:$0xf]
      %v932 = vld [vmem:[#allocation9 + $0x7c] sm:$0xf]
      %v933 = vld [vmem:[%s4] sm:$0x1]
      %v935 = vlaneseq
      %v936 = vshrl.u32 %v935, 7
      %v937 = vsub.s32 0, %v936
      %v938 = vrot.slane %v933, %v937
      %v972 = vunpack.c.l.b16 %v901
      %v973 = vunpack.c.l.b16 %v902
      %v974 = vunpack.c.l.b16 %v903
      %v975 = vunpack.c.l.b16 %v904
      %v976 = vunpack.c.l.b16 %v905
      %v977 = vunpack.c.l.b16 %v906
      %v978 = vunpack.c.l.b16 %v907
      %v979 = vunpack.c.l.b16 %v908
      %v980 = vunpack.c.l.b16 %v909
      %v981 = vunpack.c.l.b16 %v910
      %v982 = vunpack.c.l.b16 %v911
      %v983 = vunpack.c.l.b16 %v912
      %v984 = vunpack.c.l.b16 %v913
      %v985 = vunpack.c.l.b16 %v914
      %v986 = vunpack.c.l.b16 %v915
      %v987 = vunpack.c.l.b16 %v916
      %v988 = vunpack.c.l.b16 %v917
      %v989 = vunpack.c.l.b16 %v918
      %v990 = vunpack.c.l.b16 %v919
      %v991 = vunpack.c.l.b16 %v920
      %v992 = vunpack.c.l.b16 %v921
      %v993 = vunpack.c.l.b16 %v922
      %v994 = vunpack.c.l.b16 %v923
      %v995 = vunpack.c.l.b16 %v924
      %v996 = vunpack.c.l.b16 %v925
      %v997 = vunpack.c.l.b16 %v926
      %v998 = vunpack.c.l.b16 %v927
      %v999 = vunpack.c.l.b16 %v928
      %v1000 = vunpack.c.l.b16 %v929
      %v1001 = vunpack.c.l.b16 %v930
      %v1002 = vunpack.c.l.b16 %v931
      %v1003 = vunpack.c.l.b16 %v932
      %v1004 = vpack.c.b16 %v973, %v972
      %v1005 = vpack.c.b16 %v975, %v974
      %v1006 = vpack.c.b16 %v977, %v976
      %v1007 = vpack.c.b16 %v979, %v978
      %v1008 = vpack.c.b16 %v981, %v980
      %v1009 = vpack.c.b16 %v983, %v982
      %v1010 = vpack.c.b16 %v985, %v984
      %v1011 = vpack.c.b16 %v987, %v986
      %v1012 = vpack.c.b16 %v989, %v988
      %v1013 = vpack.c.b16 %v991, %v990
      %v1014 = vpack.c.b16 %v993, %v992
      %v1015 = vpack.c.b16 %v995, %v994
      %v1016 = vpack.c.b16 %v997, %v996
      %v1017 = vpack.c.b16 %v999, %v998
      %v1018 = vpack.c.b16 %v1001, %v1000
      %v1019 = vpack.c.b16 %v1003, %v1002
      %1036 = vmatprep.subr.bf16.mxu0 0
      %1037 = vmatpush1.bf16.msra.mxu0 %v1004
      %1038 = vmatprep.subr.bf16.mxu0 0
      %1039 = vmatpush1.bf16.msra.mxu0 %v1005
      %1040 = vmatprep.subr.bf16.mxu0 0
      %1041 = vmatpush1.bf16.msra.mxu0 %v1006
      %1042 = vmatprep.subr.bf16.mxu0 0
      %1043 = vmatpush1.bf16.msra.mxu0 %v1007
      %1044 = vmatprep.subr.bf16.mxu0 0
      %1045 = vmatpush1.bf16.msra.mxu0 %v1008
      %1046 = vmatprep.subr.bf16.mxu0 0
      %1047 = vmatpush1.bf16.msra.mxu0 %v1009
      %1048 = vmatprep.subr.bf16.mxu0 0
      %1049 = vmatpush1.bf16.msra.mxu0 %v1010
      %1050 = vmatprep.subr.bf16.mxu0 0
      %1051 = vmatpush1.bf16.msra.mxu0 %v1011
      %1052 = vmatprep.subr.bf16.mxu0 0
      %1053 = vmatpush1.bf16.msra.mxu0 %v1012
      %1054 = vmatprep.subr.bf16.mxu0 0
      %1055 = vmatpush1.bf16.msra.mxu0 %v1013
      %1056 = vmatprep.subr.bf16.mxu0 0
      %1057 = vmatpush1.bf16.msra.mxu0 %v1014
      %1058 = vmatprep.subr.bf16.mxu0 0
      %1059 = vmatpush1.bf16.msra.mxu0 %v1015
      %1060 = vmatprep.subr.bf16.mxu0 0
      %1061 = vmatpush1.bf16.msra.mxu0 %v1016
      %1062 = vmatprep.subr.bf16.mxu0 0
      %1063 = vmatpush1.bf16.msra.mxu0 %v1017
      %1064 = vmatprep.subr.bf16.mxu0 0
      %1065 = vmatpush1.bf16.msra.mxu0 %v1018
      %1066 = vmatprep.subr.bf16.mxu0 0
      %1067 = vmatpush1.bf16.msra.mxu0 %v1019
      %1068 = vmatprep.mubr.bf16.mxu0 %v870
      %1069 = vmatmul.mubr.bf16.gmra.mrb[0].mxu0 %v869
      %v1070 = vpop.f32.mrb[0].mxu0
      %v1071 = vadd.f32 %v938, %v1070
      %v1072 = vpop.f32.mrb[0].mxu0
      %v1073 = vpop.f32.mrb[0].mxu0
      %v1074 = vadd.f32 %v938, %v1073
      %v1075 = vpop.f32.mrb[0].mxu0
      %1076 = vmatprep.mubr.bf16.mxu0 %v872
      %1077 = vmatmul.mubr.bf16.gmra.mrb[0].mxu0 %v871
      %v1078 = vpop.f32.mrb[0].mxu0
      %v1079 = vadd.f32 %v938, %v1078
      %v1080 = vpop.f32.mrb[0].mxu0
      %v1081 = vpop.f32.mrb[0].mxu0
      %v1082 = vadd.f32 %v938, %v1081
      %v1083 = vpop.f32.mrb[0].mxu0
      %1084 = vmatprep.mubr.bf16.mxu0 %v874
      %1085 = vmatmul.mubr.bf16.gmra.mrb[0].mxu0 %v873
      %v1086 = vpop.f32.mrb[0].mxu0
      %v1087 = vadd.f32 %v938, %v1086
      %v1088 = vpop.f32.mrb[0].mxu0
      %v1089 = vpop.f32.mrb[0].mxu0
      %v1090 = vadd.f32 %v938, %v1089
      %v1091 = vpop.f32.mrb[0].mxu0
      %1092 = vmatprep.mubr.bf16.mxu0 %v876
      %1093 = vmatmul.mubr.bf16.gmra.mrb[0].mxu0 %v875
      %v1094 = vpop.f32.mrb[0].mxu0
      %v1095 = vadd.f32 %v938, %v1094
      %v1096 = vpop.f32.mrb[0].mxu0
      %v1097 = vpop.f32.mrb[0].mxu0
      %v1098 = vadd.f32 %v938, %v1097
      %v1099 = vpop.f32.mrb[0].mxu0
      %1100 = vmatprep.mubr.bf16.mxu0 %v878
      %1101 = vmatmul.mubr.bf16.gmra.mrb[0].mxu0 %v877
      %v1102 = vpop.f32.mrb[0].mxu0
      %v1103 = vadd.f32 %v938, %v1102
      %v1104 = vpop.f32.mrb[0].mxu0
      %v1105 = vpop.f32.mrb[0].mxu0
      %v1106 = vadd.f32 %v938, %v1105
      %v1107 = vpop.f32.mrb[0].mxu0
      %1108 = vmatprep.mubr.bf16.mxu0 %v880
      %1109 = vmatmul.mubr.bf16.gmra.mrb[0].mxu0 %v879
      %v1110 = vpop.f32.mrb[0].mxu0
      %v1111 = vadd.f32 %v938, %v1110
      %v1112 = vpop.f32.mrb[0].mxu0
      %v1113 = vpop.f32.mrb[0].mxu0
      %v1114 = vadd.f32 %v938, %v1113
      %v1115 = vpop.f32.mrb[0].mxu0
      %1116 = vmatprep.mubr.bf16.mxu0 %v882
      %1117 = vmatmul.mubr.bf16.gmra.mrb[0].mxu0 %v881
      %v1118 = vpop.f32.mrb[0].mxu0
      %v1119 = vadd.f32 %v938, %v1118
      %v1120 = vpop.f32.mrb[0].mxu0
      %v1121 = vpop.f32.mrb[0].mxu0
      %v1122 = vadd.f32 %v938, %v1121
      %v1123 = vpop.f32.mrb[0].mxu0
      %1124 = vmatprep.mubr.bf16.mxu0 %v884
      %1125 = vmatmul.mubr.bf16.gmra.mrb[0].mxu0 %v883
      %v1126 = vpop.f32.mrb[0].mxu0
      %v1127 = vadd.f32 %v938, %v1126
      %v1128 = vpop.f32.mrb[0].mxu0
      %v1129 = vpop.f32.mrb[0].mxu0
      %v1130 = vadd.f32 %v938, %v1129
      %v1131 = vpop.f32.mrb[0].mxu0
      %1132 = vmatprep.mubr.bf16.mxu0 %v886
      %1133 = vmatmul.mubr.bf16.gmra.mrb[0].mxu0 %v885
      %v1134 = vpop.f32.mrb[0].mxu0
      %v1135 = vadd.f32 %v938, %v1134
      %v1136 = vpop.f32.mrb[0].mxu0
      %v1137 = vpop.f32.mrb[0].mxu0
      %v1138 = vadd.f32 %v938, %v1137
      %v1139 = vpop.f32.mrb[0].mxu0
      %1140 = vmatprep.mubr.bf16.mxu0 %v888
      %1141 = vmatmul.mubr.bf16.gmra.mrb[0].mxu0 %v887
      %v1142 = vpop.f32.mrb[0].mxu0
      %v1143 = vadd.f32 %v938, %v1142
      %v1144 = vpop.f32.mrb[0].mxu0
      %v1145 = vpop.f32.mrb[0].mxu0
      %v1146 = vadd.f32 %v938, %v1145
      %v1147 = vpop.f32.mrb[0].mxu0
      %1148 = vmatprep.mubr.bf16.mxu0 %v890
      %1149 = vmatmul.mubr.bf16.gmra.mrb[0].mxu0 %v889
      %v1150 = vpop.f32.mrb[0].mxu0
      %v1151 = vadd.f32 %v938, %v1150
      %v1152 = vpop.f32.mrb[0].mxu0
      %v1153 = vpop.f32.mrb[0].mxu0
      %v1154 = vadd.f32 %v938, %v1153
      %v1155 = vpop.f32.mrb[0].mxu0
      %1156 = vmatprep.mubr.bf16.mxu0 %v892
      %1157 = vmatmul.mubr.bf16.gmra.mrb[0].mxu0 %v891
      %v1158 = vpop.f32.mrb[0].mxu0
      %v1159 = vadd.f32 %v938, %v1158
      %v1160 = vpop.f32.mrb[0].mxu0
      %v1161 = vpop.f32.mrb[0].mxu0
      %v1162 = vadd.f32 %v938, %v1161
      %v1163 = vpop.f32.mrb[0].mxu0
      %1164 = vmatprep.mubr.bf16.mxu0 %v894
      %1165 = vmatmul.mubr.bf16.gmra.mrb[0].mxu0 %v893
      %v1166 = vpop.f32.mrb[0].mxu0
      %v1167 = vadd.f32 %v938, %v1166
      %v1168 = vpop.f32.mrb[0].mxu0
      %v1169 = vpop.f32.mrb[0].mxu0
      %v1170 = vadd.f32 %v938, %v1169
      %v1171 = vpop.f32.mrb[0].mxu0
      %1172 = vmatprep.mubr.bf16.mxu0 %v896
      %1173 = vmatmul.mubr.bf16.gmra.mrb[0].mxu0 %v895
      %v1174 = vpop.f32.mrb[0].mxu0
      %v1175 = vadd.f32 %v938, %v1174
      %v1176 = vpop.f32.mrb[0].mxu0
      %v1177 = vpop.f32.mrb[0].mxu0
      %v1178 = vadd.f32 %v938, %v1177
      %v1179 = vpop.f32.mrb[0].mxu0
      %1180 = vmatprep.mubr.bf16.mxu0 %v898
      %1181 = vmatmul.mubr.bf16.gmra.mrb[0].mxu0 %v897
      %v1182 = vpop.f32.mrb[0].mxu0
      %v1183 = vadd.f32 %v938, %v1182
      %v1184 = vpop.f32.mrb[0].mxu0
      %v1185 = vpop.f32.mrb[0].mxu0
      %v1186 = vadd.f32 %v938, %v1185
      %v1187 = vpop.f32.mrb[0].mxu0
      %1188 = vmatprep.mubr.bf16.mxu0 %v900
      %1189 = vmatmul.mubr.bf16.gmra.mrb[0].mxu0 %v899
      %v1190 = vpop.f32.mrb[0].mxu0
      %v1191 = vadd.f32 %v938, %v1190
      %v1192 = vpop.f32.mrb[0].mxu0
      %v1193 = vpop.f32.mrb[0].mxu0
      %v1194 = vadd.f32 %v938, %v1193
      %v1195 = vpop.f32.mrb[0].mxu0
      %1196 = vdwg.mxu0
      %1197 = vst [vmem:[#allocation11] sm:$0xff] %v1071
      %1198 = vst [vmem:[#allocation11 + $0x8] sm:$0xff] %v1074
      %1199 = vst [vmem:[#allocation11 + $0x10] sm:$0xff] %v1079
      %1200 = vst [vmem:[#allocation11 + $0x18] sm:$0xff] %v1082
      %1201 = vst [vmem:[#allocation11 + $0x20] sm:$0xff] %v1087
      %1202 = vst [vmem:[#allocation11 + $0x28] sm:$0xff] %v1090
      %1203 = vst [vmem:[#allocation11 + $0x30] sm:$0xff] %v1095
      %1204 = vst [vmem:[#allocation11 + $0x38] sm:$0xff] %v1098
      %1205 = vst [vmem:[#allocation11 + $0x40] sm:$0xff] %v1103
      %1206 = vst [vmem:[#allocation11 + $0x48] sm:$0xff] %v1106
      %1207 = vst [vmem:[#allocation11 + $0x50] sm:$0xff] %v1111
      %1208 = vst [vmem:[#allocation11 + $0x58] sm:$0xff] %v1114
      %1209 = vst [vmem:[#allocation11 + $0x60] sm:$0xff] %v1119
      %1210 = vst [vmem:[#allocation11 + $0x68] sm:$0xff] %v1122
      %1211 = vst [vmem:[#allocation11 + $0x70] sm:$0xff] %v1127
      %1212 = vst [vmem:[#allocation11 + $0x78] sm:$0xff] %v1130
      %1213 = vst [vmem:[#allocation11 + $0x80] sm:$0xff] %v1135
      %1214 = vst [vmem:[#allocation11 + $0x88] sm:$0xff] %v1138
      %1215 = vst [vmem:[#allocation11 + $0x90] sm:$0xff] %v1143
      %1216 = vst [vmem:[#allocation11 + $0x98] sm:$0xff] %v1146
      %1217 = vst [vmem:[#allocation11 + $0xa0] sm:$0xff] %v1151
      %1218 = vst [vmem:[#allocation11 + $0xa8] sm:$0xff] %v1154
      %1219 = vst [vmem:[#allocation11 + $0xb0] sm:$0xff] %v1159
      %1220 = vst [vmem:[#allocation11 + $0xb8] sm:$0xff] %v1162
      %1221 = vst [vmem:[#allocation11 + $0xc0] sm:$0xff] %v1167
      %1222 = vst [vmem:[#allocation11 + $0xc8] sm:$0xff] %v1170
      %1223 = vst [vmem:[#allocation11 + $0xd0] sm:$0xff] %v1175
      %1224 = vst [vmem:[#allocation11 + $0xd8] sm:$0xff] %v1178
      %1225 = vst [vmem:[#allocation11 + $0xe0] sm:$0xff] %v1183
      %1226 = vst [vmem:[#allocation11 + $0xe8] sm:$0xff] %v1186
      %1227 = vst [vmem:[#allocation11 + $0xf0] sm:$0xff] %v1191
      %1228 = vst [vmem:[#allocation11 + $0xf8] sm:$0xff] %v1194
    $region45: #{tpu_custom_call.1} parent=1 // pred_fallthru
      _
    // Predicated region
    $region46: #{tpu_custom_call.1} parent=1 // pred_check
      _
    $region47: #{tpu_custom_call.1} parent=1 // pred_check_branch
      %1230 = sbr.rel (0) target = $region49
    $region48: #{tpu_custom_call.1} parent=1 // pred_region
      %s1232 = ssub.s32 4096, 4096
      %1233 = vsyncadd [#allocation5], %s1232
      %s1234 = sshll.u32 [#allocation11], 4
      %s1235 = int_to_ptr.vmem [resolvable:$true] %s1234
      %1240 = dma.vmem_to_hbm [thread:$0]  %s1235, 4096, %s5, [#allocation5], 128, 128, 8
    $region49: #{tpu_custom_call.1} parent=1 // pred_fallthru
      _
    // Predicated region
    $region50: #{tpu_custom_call.1} parent=1 // pred_check
      _
    $region51: #{tpu_custom_call.1} parent=1 // pred_check_branch
      %1242 = sbr.rel (0) target = $region53
    $region52: #{tpu_custom_call.1} parent=1 // pred_region
      %1243 = dma.done [#allocation5], 4096
    $region53: #{tpu_custom_call.1} parent=1 // pred_fallthru
      _
    %1244 = vsyncpa [#allocation4], 1
    %1245 = vsyncpa [#allocation7], 1
    %1246 = vsyncpa [#allocation10], 1
    %1247 = vsyncpa [#allocation5], 1

</llo_original>
